<compile_context>
chip_gen: v7x
topology: tpu7x:2x2x1
jax: 0.10.0
libtpu: 0.0.40
codegen_flags: <defaults>
</compile_context>

<pallas_src>
import functools

import jax
import jax.numpy as jnp
from jax.experimental import pallas as pl
from jax.experimental.pallas import tpu as pltpu


# ----------------------------------------------------------------------------
# Pallas kernel: one (tm, tn) output tile = x_tile(tm, K) @ w_tile(K, tn) + b
# ----------------------------------------------------------------------------
def _linear_kernel(x_ref, w_ref, b_ref, o_ref):
    o_ref[...] = (
        jnp.dot(x_ref[...], w_ref[...], preferred_element_type=jnp.float32)
        + b_ref[...]
    ).astype(o_ref.dtype)


def _round_up(a, m):
    return (a + m - 1) // m * m


_SUBLANE_BF16 = 16  # bf16 packs 16 rows per sublane group


@functools.partial(jax.jit, static_argnames=("tn", "tm_max"))
def pallas_linear(x, w_t, b, *, tn=256, tm_max=512):
    """Pallas linear layer: x:(M,K) f32, w_t:(K,N) bf16, b:(1,N) f32 -> (M,N) f32."""
    M, K = x.shape
    Kw, N = w_t.shape
    assert K == Kw and N % tn == 0, (x.shape, w_t.shape, tn)

    # Feed the MXU its native bf16 path; accumulation stays f32 in-kernel.
    x = x.astype(jnp.bfloat16)

    # M tiling: pad to a sublane multiple, cap the tile so VMEM stays bounded
    # for any batch size (tm=512: ~7 MiB total double-buffered footprint).
    tm = min(_round_up(M, _SUBLANE_BF16), tm_max)
    m_pad = _round_up(M, tm)
    if m_pad != M:
        x = jnp.pad(x, ((0, m_pad - M), (0, 0)))

    grid = (m_pad // tm, N // tn)  # no reduction axis: full-K blocks
    out = pl.pallas_call(
        _linear_kernel,
        out_shape=jax.ShapeDtypeStruct((m_pad, N), jnp.float32),
        grid_spec=pltpu.PrefetchScalarGridSpec(
            num_scalar_prefetch=0,
            grid=grid,
            in_specs=[
                # Activations: constant in j -> resident across the N axis.
                pl.BlockSpec((tm, K), lambda i, j: (i, 0)),
                # Weights: full-K, lane-dense tn slab, streamed over j.
                pl.BlockSpec((K, tn), lambda i, j: (0, j)),
                # Bias.
                pl.BlockSpec((1, tn), lambda i, j: (0, j)),
            ],
            out_specs=pl.BlockSpec((tm, tn), lambda i, j: (i, j)),
        ),
        compiler_params=pltpu.CompilerParams(
            dimension_semantics=("parallel", "parallel")
        ),
    )(x, w_t, b)
    return out[:M] if m_pad != M else out


# ----------------------------------------------------------------------------
# Faithful port of SenderChexpert
# ----------------------------------------------------------------------------
class SenderChexpertPallas:
    """JAX/Pallas counterpart of the PyTorch SenderChexpert module."""

    def __init__(self, model, num_ftrs=2048, output_size=512, *, key=None):
        # `model` is an arbitrary backbone callable, exactly as in PyTorch.
        self.model = model
        if key is None:
            key = jax.random.PRNGKey(0)
        kw, kb = jax.random.split(key)
        # nn.Linear default init: U(-1/sqrt(fan_in), 1/sqrt(fan_in)).
        bound = 1.0 / (num_ftrs ** 0.5)
        w = jax.random.uniform(
            kw, (output_size, num_ftrs), jnp.float32, -bound, bound
        )
        b = jax.random.uniform(kb, (output_size,), jnp.float32, -bound, bound)
        # Pre-transpose once and store in bf16: layout plumbing + halves the
        # HBM bytes of the weight stream the kernel is bound by.
        self.w_t = jnp.asarray(w).T.astype(jnp.bfloat16)   # (num_ftrs, output_size)
        self.b = jnp.asarray(b).reshape(1, output_size)     # f32 bias

    def __call__(self, x):
        # `with torch.no_grad(): x = self.model(x)` -> stop_gradient in JAX.
        feats = jax.lax.stop_gradient(self.model(x))
        return pallas_linear(feats, self.w_t, self.b)

    forward = __call__


if __name__ == "__main__":
    key = jax.random.PRNGKey(0)
    k_img, k_bb, k_fc = jax.random.split(key, 3)

    batch, c, h, w = 2, 4, 16, 16
    num_ftrs, output_size = 2048, 512

    x_img = jax.random.normal(k_img, (batch, c, h, w), dtype=jnp.float32)

    # TODO(synk): the backbone `model` is an arbitrary external nn.Module whose
    # architecture is not given in the spec; stand in with a fixed random
    # linear feature extractor (flatten -> num_ftrs) in plain JAX.
    proj = jax.random.normal(k_bb, (c * h * w, num_ftrs), jnp.float32) * 0.02

    def backbone(imgs):
        return imgs.reshape(imgs.shape[0], -1) @ proj  # (batch, num_ftrs)

    model = SenderChexpertPallas(backbone, num_ftrs, output_size, key=k_fc)
    y = model(x_img)
    jax.block_until_ready(y)
    assert y.shape == (batch, output_size), y.shape

    # Reference check: same bf16-cast inputs, plain-JAX f32 math.
    feats = backbone(x_img)
    y_ref = (
        feats.astype(jnp.bfloat16).astype(jnp.float32)
        @ model.w_t.astype(jnp.float32)
        + model.b
    )
    assert bool(jnp.allclose(y, y_ref, atol=1e-2, rtol=1e-2)), float(
        jnp.max(jnp.abs(y - y_ref))
    )

    print("KERNEL_OK")
</pallas_src>

<mosaic_0001>
module attributes {stable_mosaic.version = 11 : i64} {
  func.func @_linear_kernel(%arg0: i32, %arg1: i32, %arg2: memref<16x2048xbf16, #tpu.memory_space<vmem>>, %arg3: memref<2048x256xbf16, #tpu.memory_space<vmem>>, %arg4: memref<1x256xf32, #tpu.memory_space<vmem>>, %arg5: memref<16x256xf32, #tpu.memory_space<vmem>>) attributes {dimension_semantics = [#tpu.dimension_semantics<parallel>, #tpu.dimension_semantics<parallel>], iteration_bounds = array<i64: 1, 2>, scalar_prefetch = 0 : i64, scratch_operands = 0 : i64, tpu.core_type = #tpu.core_type<tc>, window_params = [{transform_indices = @transform_0, window_bounds = array<i64: 16, 2048>}, {transform_indices = @transform_1, window_bounds = array<i64: 2048, 256>}, {transform_indices = @transform_2, window_bounds = array<i64: 1, 256>}, {transform_indices = @transform_3, window_bounds = array<i64: 16, 256>}]} {
    %c0 = arith.constant 0 : index
    %c0_0 = arith.constant 0 : index
    %0 = vector.load %arg2[%c0, %c0_0] : memref<16x2048xbf16, #tpu.memory_space<vmem>>, vector<16x2048xbf16>
    %c0_1 = arith.constant 0 : index
    %c0_2 = arith.constant 0 : index
    %1 = vector.load %arg3[%c0_1, %c0_2] : memref<2048x256xbf16, #tpu.memory_space<vmem>>, vector<2048x256xbf16>
    %cst = arith.constant dense<0.000000e+00> : vector<16x256xf32>
    %2 = tpu.matmul %0, %1, %cst {dimension_numbers = #tpu.dot_dimension_numbers<[1], [0], [0], [1], [0, 0, 1, 1], [], []>} : vector<16x2048xbf16>, vector<2048x256xbf16>, vector<16x256xf32> -> vector<16x256xf32>
    %c0_3 = arith.constant 0 : index
    %c0_4 = arith.constant 0 : index
    %3 = vector.load %arg4[%c0_3, %c0_4] : memref<1x256xf32, #tpu.memory_space<vmem>>, vector<1x256xf32>
    %4 = vector.broadcast %3 : vector<1x256xf32> to vector<16x256xf32>
    %5 = arith.addf %2, %4 : vector<16x256xf32>
    %c0_5 = arith.constant 0 : index
    %c0_6 = arith.constant 0 : index
    %6 = vector.load %arg5[%c0_5, %c0_6] : memref<16x256xf32, #tpu.memory_space<vmem>>, vector<16x256xf32>
    tpu.vector_store %arg5[%c0_5, %c0_6], %5 {strides = array<i32>} : memref<16x256xf32, #tpu.memory_space<vmem>>, vector<16x256xf32>,
    return
  }
  func.func @transform_0(%arg0: i32, %arg1: i32) -> (i32, i32) {
    %c0_i32 = arith.constant 0 : i32
    %c0_i32_0 = arith.constant 0 : i32
    return %arg0, %c0_i32 : i32, i32
  }
  func.func @transform_1(%arg0: i32, %arg1: i32) -> (i32, i32) {
    %c0_i32 = arith.constant 0 : i32
    %c0_i32_0 = arith.constant 0 : i32
    return %c0_i32, %arg1 : i32, i32
  }
  func.func @transform_2(%arg0: i32, %arg1: i32) -> (i32, i32) {
    %c0_i32 = arith.constant 0 : i32
    %c0_i32_0 = arith.constant 0 : i32
    return %c0_i32, %arg1 : i32, i32
  }
  func.func @transform_3(%arg0: i32, %arg1: i32) -> (i32, i32) {
    %c0_i32 = arith.constant 0 : i32
    return %arg0, %arg1 : i32, i32
  }
}

</mosaic_0001>

<llo_original>
// kernel: pallas_linear.1
$region0: #{pallas_linear.1}
  #allocation0 [shape = 'u32[]', space=smem, size = 0x4, offset = 0x4, fixed_abs, tag = 'smem constant byte address 0x4 - core index']
  #allocation1 [shape = 'u32[144,128]{1,0:T(1,128)}', space=vmem, size = 0x12000, scoped, tag = 'internal scratch']
  %s0 = inlined_call_operand.vmem [shape: bf16[16,2048], index: 0, kind: input, shape index: {}]
  %s1 = inlined_call_operand.hbm [shape: bf16[2048,512], index: 1, kind: input, shape index: {}]
  %s2 = inlined_call_operand.hbm [shape: f32[1,512], index: 2, kind: input, shape index: {}]
  %s3 = inlined_call_operand.vmem [shape: f32[16,512], index: 3, kind: output, shape index: {}]
  %s4 = sld [smem:[#allocation0]]
  $region72: #{pallas_linear.1} parent=0
    _
  %s6 = ssub.s32 1, %s4
  %s7 = scalar_select 0, %s6, %s4
  $region1: #{pallas_linear.1} parent=0
    #allocation2 [shape = 'u8[2097152]{0}', space=vmem, size = 0x200000, scoped, tag = 'input window, operand 1']
    #allocation3 [shape = 's32[2]{0}', space=sflag, size = 0x8, scoped, tag = 'scoped memory for pallas_linear.1']
    #allocation4 [shape = 'u8[2048]{0}', space=vmem, size = 0x800, scoped, tag = 'input window, operand 2']
    #allocation5 [shape = 's32[2]{0}', space=sflag, size = 0x8, scoped, tag = 'scoped memory for pallas_linear.1']
    #allocation6 [shape = 'u8[32768]{0}', space=vmem, size = 0x8000, scoped, tag = 'output window, operand 0']
    %8 = vsyncpa [#allocation3], 0
    %s9 = scalar_lea.sflag [#allocation3], 1
    %10 = vsyncpa %s9, 0
    %11 = vsyncpa [#allocation5], 0
    %s12 = scalar_lea.sflag [#allocation5], 1
    %13 = vsyncpa %s12, 0
    loop: start=0, step=1, limit=4
    $region2: #{pallas_linear.1} parent=1 // loop_pre_header
      _
    $region3: #{pallas_linear.1} parent=1 // loop_header
      %s15 = sphi 0, %s19
      %p16 = scmp.ge.s32.totalorder %s15, 4
      %s22 = sphi 0, %s34
      %s23 = sphi 0, %s30
      %s24 = sphi 0, %s22
      %s25 = sphi 0, %s23
      %s26 = sphi 0, %s24
      %s27 = sphi 0, %s25
      %s37 = sphi 0, %s39
      %s40 = sphi 0, %s37
      %s41 = sphi 0, %s40
      %s57 = sphi 0, %s41
      %s63 = sphi 0, %s65
      %s66 = sphi 0, %s63
      %s67 = sphi 0, %s66
      %s83 = sphi 0, %s67
      %s89 = sphi 0, %s91
      %s92 = sphi 0, %s89
      %s93 = sphi 0, %s92
      %s109 = sphi 0, %s93
      %s117 = sphi 0, %s119
      %s120 = sphi 0, %s117
      %s121 = sphi 0, %s120
      %s137 = sphi 0, %s121
    $region4: #{pallas_linear.1} parent=1 // loop_header_branch
      %18 = sbr.rel (%p16) target = $region8
    $region5: #{pallas_linear.1} parent=1 // loop_body
      %s20 = ssub.s32 %s15, 1
      %s21 = ssub.s32 %s15, 2
      %s28 = sadd.s32 1, %s23
      %p29 = scmp.ge.s32.totalorder %s28, 2
      %s30 = scalar_select %p29, 0, %s28
      %s31 = sadd.s32 1, %s22
      %s32 = scalar_select %p29, %s31, %s22
      %p33 = scmp.ge.s32.totalorder %s32, 1
      %s34 = scalar_select %p33, 0, %s32
      %s35 = ssub.s32 %s22, %s34
      %p36 = scmp.eq.s32.totalorder %s35, 0
      %s38 = sadd.s32 %s37, 1
      %s39 = scalar_select %p36, %s37, %s38
      %p42 = pneg %p36
      %p43 = scmp.eq.s32.totalorder %s15, 1
      %p44 = por %p42, %p43
      %p45 = scmp.ne.s32.totalorder %s37, %s40
      %p46 = scmp.eq.s32.totalorder %s15, 0
      %p47 = por %p45, %p46
      %p48 = scmp.ne.s32.totalorder %s37, %s40
      %p49 = scmp.eq.s32.totalorder %s20, 1
      %p50 = por %p48, %p49
      %p51 = scmp.ne.s32.totalorder %s40, %s41
      %p52 = scmp.eq.s32.totalorder %s20, 0
      %p53 = por %p51, %p52
      %p54 = scmp.ne.s32.totalorder %s40, %s41
      %p55 = scmp.eq.s32.totalorder %s21, 1
      %p56 = por %p54, %p55
      %p58 = scmp.ne.s32.totalorder %s41, %s57
      %p59 = scmp.eq.s32.totalorder %s21, 0
      %p60 = por %p58, %p59
      %s61 = ssub.s32 %s23, %s30
      %p62 = scmp.eq.s32.totalorder %s61, 0
      %s64 = sadd.s32 %s63, 1
      %s65 = scalar_select %p62, %s63, %s64
      %p68 = pneg %p62
      %p69 = scmp.eq.s32.totalorder %s15, 1
      %p70 = por %p68, %p69
      %p71 = scmp.ne.s32.totalorder %s63, %s66
      %p72 = scmp.eq.s32.totalorder %s15, 0
      %p73 = por %p71, %p72
      %p74 = scmp.ne.s32.totalorder %s63, %s66
      %p75 = scmp.eq.s32.totalorder %s20, 1
      %p76 = por %p74, %p75
      %p77 = scmp.ne.s32.totalorder %s66, %s67
      %p78 = scmp.eq.s32.totalorder %s20, 0
      %p79 = por %p77, %p78
      %p80 = scmp.ne.s32.totalorder %s66, %s67
      %p81 = scmp.eq.s32.totalorder %s21, 1
      %p82 = por %p80, %p81
      %p84 = scmp.ne.s32.totalorder %s67, %s83
      %p85 = scmp.eq.s32.totalorder %s21, 0
      %p86 = por %p84, %p85
      %s87 = ssub.s32 %s23, %s30
      %p88 = scmp.eq.s32.totalorder %s87, 0
      %s90 = sadd.s32 %s89, 1
      %s91 = scalar_select %p88, %s89, %s90
      %p94 = pneg %p88
      %p95 = scmp.eq.s32.totalorder %s15, 1
      %p96 = por %p94, %p95
      %p97 = scmp.ne.s32.totalorder %s89, %s92
      %p98 = scmp.eq.s32.totalorder %s15, 0
      %p99 = por %p97, %p98
      %p100 = scmp.ne.s32.totalorder %s89, %s92
      %p101 = scmp.eq.s32.totalorder %s20, 1
      %p102 = por %p100, %p101
      %p103 = scmp.ne.s32.totalorder %s92, %s93
      %p104 = scmp.eq.s32.totalorder %s20, 0
      %p105 = por %p103, %p104
      %p106 = scmp.ne.s32.totalorder %s92, %s93
      %p107 = scmp.eq.s32.totalorder %s21, 1
      %p108 = por %p106, %p107
      %p110 = scmp.ne.s32.totalorder %s93, %s109
      %p111 = scmp.eq.s32.totalorder %s21, 0
      %p112 = por %p110, %p111
      %s113 = ssub.s32 %s22, %s34
      %s114 = ssub.s32 %s23, %s30
      %s115 = sor.u32 %s113, %s114
      %p116 = scmp.eq.s32.totalorder %s115, 0
      %s118 = sadd.s32 %s117, 1
      %s119 = scalar_select %p116, %s117, %s118
      %p122 = pneg %p116
      %p123 = scmp.eq.s32.totalorder %s15, 1
      %p124 = por %p122, %p123
      %p125 = scmp.ne.s32.totalorder %s117, %s120
      %p126 = scmp.eq.s32.totalorder %s15, 0
      %p127 = por %p125, %p126
      %p128 = scmp.ne.s32.totalorder %s117, %s120
      %p129 = scmp.eq.s32.totalorder %s20, 1
      %p130 = por %p128, %p129
      %p131 = scmp.ne.s32.totalorder %s120, %s121
      %p132 = scmp.eq.s32.totalorder %s20, 0
      %p133 = por %p131, %p132
      %p134 = scmp.ne.s32.totalorder %s120, %s121
      %p135 = scmp.eq.s32.totalorder %s21, 1
      %p136 = por %p134, %p135
      %p138 = scmp.ne.s32.totalorder %s121, %s137
      %p139 = scmp.eq.s32.totalorder %s21, 0
      %p140 = por %p138, %p139
      %p141 = scmp.le.s32.totalorder 1, %s15
      %p142 = scmp.lt.s32.totalorder %s15, 3
      %p143 = pnand %p141, %p142
      %p144 = pneg %p143
      // Predicated region
      $region9: #{pallas_linear.1} parent=5 // pred_check
        _
      $region10: #{pallas_linear.1} parent=5 // pred_check_branch
        %146 = sbr.rel (%p143) target = $region12
      $region11: #{pallas_linear.1} parent=5 // pred_region
        %s147 = ssub.s32 %s15, 1
        // Predicated region
        $region13: #{pallas_linear.1} parent=11 // pred_check
          %p148 = pneg %p53
        $region14: #{pallas_linear.1} parent=11 // pred_check_branch
          %150 = sbr.rel (%p148) target = $region16
        $region15: #{pallas_linear.1} parent=11 // pred_region
          %s151 = smul.u32 2, %s24
          %p152 = scmp.lt.s32.totalorder %s151, 1
          %s153 = scalar_select %p152, %s151, 1
          %s154 = smul.addr %s153, 16
          %s155 = smul.addr %s154, 4
          %s156 = scalar_lea.vmem %s0, %s155
          %s157 = smul.u32 2, %s24
        $region16: #{pallas_linear.1} parent=11 // pred_fallthru
          _
      $region12: #{pallas_linear.1} parent=5 // pred_fallthru
        _
      %p158 = scmp.lt.s32.totalorder %s15, 2
      // Predicated region
      $region17: #{pallas_linear.1} parent=5 // pred_check
        %p159 = pneg %p158
      $region18: #{pallas_linear.1} parent=5 // pred_check_branch
        %161 = sbr.rel (%p159) target = $region20
      $region19: #{pallas_linear.1} parent=5 // pred_region
        // Predicated region
        $region21: #{pallas_linear.1} parent=19 // pred_check
          %p162 = pneg %p73
        $region22: #{pallas_linear.1} parent=19 // pred_check_branch
          %164 = sbr.rel (%p162) target = $region24
        $region23: #{pallas_linear.1} parent=19 // pred_region
          %s165 = sand.u32 %s63, 1
          %s166 = scalar_lea.sflag [#allocation3], %s165
          %s167 = sand.u32 %s63, 1
          %s168 = smul.addr %s167, 2048
          %s169 = scalar_lea.vmem [#allocation2], %s168
          %s170 = smul.u32 2, %s23
          %s172 = ssub.s32 32768, 32768
          %173 = vsyncadd %s166, %s172
          %s174 = smul.addr %s170, 64
          %s175 = scalar_lea.hbm %s1, %s174
          %s176 = sshll.u32 %s169, 4
          %s177 = int_to_ptr.vmem [resolvable:$true] %s176
          %182 = dma.hbm_to_vmem [thread:$0]  %s175, 32768, %s177, %s166, 256, 128, 8
        $region24: #{pallas_linear.1} parent=19 // pred_fallthru
          _
        // Predicated region
        $region25: #{pallas_linear.1} parent=19 // pred_check
          %p183 = pneg %p99
        $region26: #{pallas_linear.1} parent=19 // pred_check_branch
          %185 = sbr.rel (%p183) target = $region28
        $region27: #{pallas_linear.1} parent=19 // pred_region
          %s186 = sand.u32 %s89, 1
          %s187 = scalar_lea.sflag [#allocation5], %s186
          %s188 = sand.u32 %s89, 1
          %s189 = smul.addr %s188, 2
          %s190 = scalar_lea.vmem [#allocation4], %s189
          %s191 = smul.u32 2, %s23
          %s193 = ssub.s32 32, 32
          %194 = vsyncadd %s187, %s193
          %s195 = smul.addr %s191, 16
          %s196 = scalar_lea.hbm %s2, %s195
          %s198 = sshll.u32 %s190, 4
          %s199 = int_to_ptr.vmem [resolvable:$true] %s198
          %201 = dma.hbm_to_vmem [thread:$0]  %s196, 32, %s199, %s187
        $region28: #{pallas_linear.1} parent=19 // pred_fallthru
          _
      $region20: #{pallas_linear.1} parent=5 // pred_fallthru
        _
      %p202 = scmp.le.s32.totalorder 1, %s15
      %p203 = scmp.lt.s32.totalorder %s15, 3
      %p204 = pnand %p202, %p203
      %p205 = pneg %p204
      // Predicated region
      $region29: #{pallas_linear.1} parent=5 // pred_check
        _
      $region30: #{pallas_linear.1} parent=5 // pred_check_branch
        %207 = sbr.rel (%p204) target = $region32
      $region31: #{pallas_linear.1} parent=5 // pred_region
        %s208 = ssub.s32 %s15, 1
        %s209 = sand.u32 %s66, 1
        %s210 = scalar_lea.sflag [#allocation3], %s209
        %s211 = sand.u32 %s66, 1
        %s212 = smul.addr %s211, 2048
        %s213 = scalar_lea.vmem [#allocation2], %s212
        // Predicated region
        $region33: #{pallas_linear.1} parent=31 // pred_check
          %p214 = pneg %p79
        $region34: #{pallas_linear.1} parent=31 // pred_check_branch
          %216 = sbr.rel (%p214) target = $region36
        $region35: #{pallas_linear.1} parent=31 // pred_region
          %217 = dma.done %s210, 32768
        $region36: #{pallas_linear.1} parent=31 // pred_fallthru
          _
        %s218 = sand.u32 %s92, 1
        %s219 = scalar_lea.sflag [#allocation5], %s218
        %s220 = sand.u32 %s92, 1
        %s221 = smul.addr %s220, 2
        %s222 = scalar_lea.vmem [#allocation4], %s221
        // Predicated region
        $region37: #{pallas_linear.1} parent=31 // pred_check
          %p223 = pneg %p105
        $region38: #{pallas_linear.1} parent=31 // pred_check_branch
          %225 = sbr.rel (%p223) target = $region40
        $region39: #{pallas_linear.1} parent=31 // pred_region
          %226 = dma.done %s219, 32
        $region40: #{pallas_linear.1} parent=31 // pred_fallthru
          _
        %s227 = smul.u32 2, %s24
        %p228 = scmp.lt.s32.totalorder %s227, 1
        %s229 = scalar_select %p228, %s227, 1
        %s230 = smul.addr %s229, 16
        %s231 = smul.addr %s230, 4
        %s232 = scalar_lea.vmem %s0, %s231
        %p233 = pneg %p53
        %p234 = pneg %p50
        %s235 = sand.u32 %s66, 1
        %s236 = scalar_lea.sflag [#allocation3], %s235
        %s237 = sand.u32 %s66, 1
        %s238 = smul.addr %s237, 2048
        %s239 = scalar_lea.vmem [#allocation2], %s238
        %p240 = pneg %p79
        %p241 = pneg %p76
        %s242 = sand.u32 %s92, 1
        %s243 = scalar_lea.sflag [#allocation5], %s242
        %s244 = sand.u32 %s92, 1
        %s245 = smul.addr %s244, 2
        %s246 = scalar_lea.vmem [#allocation4], %s245
        %p247 = pneg %p105
        %p248 = pneg %p102
        %p249 = pneg %p133
        %p250 = pneg %p130
        %s251 = sand.u32 %s120, 1
        %s252 = sand.u32 %s120, 1
        %s253 = smul.addr %s252, 32
        %s254 = scalar_lea.vmem [#allocation6], %s253
        %s255 = smul.u32 2, %s24
        %p256 = scmp.lt.s32.totalorder %s255, 1
        %s257 = scalar_select %p256, %s255, 1
        %s258 = smul.addr %s257, 16
        %s259 = smul.addr %s258, 4
        %s260 = scalar_lea.vmem %s0, %s259
        %s261 = smul.u32 2, %s24
        %s262 = smul.u32 2, %s25
        %s263 = smul.u32 2, %s25
        %s264 = smul.u32 2, %s24
        %s265 = smul.u32 2, %s25
        %v266 = vld [vmem:[%s260] sm:$0xff]
        %v267 = vld [vmem:[%s260 + $0x8] sm:$0xff]
        %v268 = vld [vmem:[%s260 + $0x10] sm:$0xff]
        %v269 = vld [vmem:[%s260 + $0x18] sm:$0xff]
        %v270 = vld [vmem:[%s260 + $0x20] sm:$0xff]
        %v271 = vld [vmem:[%s260 + $0x28] sm:$0xff]
        %v272 = vld [vmem:[%s260 + $0x30] sm:$0xff]
        %v273 = vld [vmem:[%s260 + $0x38] sm:$0xff]
        %v274 = vld [vmem:[%s260 + $0x40] sm:$0xff]
        %v275 = vld [vmem:[%s260 + $0x48] sm:$0xff]
        %v276 = vld [vmem:[%s260 + $0x50] sm:$0xff]
        %v277 = vld [vmem:[%s260 + $0x58] sm:$0xff]
        %v278 = vld [vmem:[%s260 + $0x60] sm:$0xff]
        %v279 = vld [vmem:[%s260 + $0x68] sm:$0xff]
        %v280 = vld [vmem:[%s260 + $0x70] sm:$0xff]
        %v281 = vld [vmem:[%s260 + $0x78] sm:$0xff]
        %v282 = vld [vmem:[%s213] sm:$0xff]
        %v283 = vld [vmem:[%s213 + $0x8] sm:$0xff]
        %v284 = vld [vmem:[%s213 + $0x10] sm:$0xff]
        %v285 = vld [vmem:[%s213 + $0x18] sm:$0xff]
        %v286 = vld [vmem:[%s213 + $0x20] sm:$0xff]
        %v287 = vld [vmem:[%s213 + $0x28] sm:$0xff]
        %v288 = vld [vmem:[%s213 + $0x30] sm:$0xff]
        %v289 = vld [vmem:[%s213 + $0x38] sm:$0xff]
        %v290 = vld [vmem:[%s213 + $0x40] sm:$0xff]
        %v291 = vld [vmem:[%s213 + $0x48] sm:$0xff]
        %v292 = vld [vmem:[%s213 + $0x50] sm:$0xff]
        %v293 = vld [vmem:[%s213 + $0x58] sm:$0xff]
        %v294 = vld [vmem:[%s213 + $0x60] sm:$0xff]
        %v295 = vld [vmem:[%s213 + $0x68] sm:$0xff]
        %v296 = vld [vmem:[%s213 + $0x70] sm:$0xff]
        %v297 = vld [vmem:[%s213 + $0x78] sm:$0xff]
        %v298 = vld [vmem:[%s213 + $0x80] sm:$0xff]
        %v299 = vld [vmem:[%s213 + $0x88] sm:$0xff]
        %v300 = vld [vmem:[%s213 + $0x90] sm:$0xff]
        %v301 = vld [vmem:[%s213 + $0x98] sm:$0xff]
        %v302 = vld [vmem:[%s213 + $0xa0] sm:$0xff]
        %v303 = vld [vmem:[%s213 + $0xa8] sm:$0xff]
        %v304 = vld [vmem:[%s213 + $0xb0] sm:$0xff]
        %v305 = vld [vmem:[%s213 + $0xb8] sm:$0xff]
        %v306 = vld [vmem:[%s213 + $0xc0] sm:$0xff]
        %v307 = vld [vmem:[%s213 + $0xc8] sm:$0xff]
        %v308 = vld [vmem:[%s213 + $0xd0] sm:$0xff]
        %v309 = vld [vmem:[%s213 + $0xd8] sm:$0xff]
        %v310 = vld [vmem:[%s213 + $0xe0] sm:$0xff]
        %v311 = vld [vmem:[%s213 + $0xe8] sm:$0xff]
        %v312 = vld [vmem:[%s213 + $0xf0] sm:$0xff]
        %v313 = vld [vmem:[%s213 + $0xf8] sm:$0xff]
        %v314 = vld [vmem:[%s213 + $0x100] sm:$0xff]
        %v315 = vld [vmem:[%s213 + $0x108] sm:$0xff]
        %v316 = vld [vmem:[%s213 + $0x110] sm:$0xff]
        %v317 = vld [vmem:[%s213 + $0x118] sm:$0xff]
        %v318 = vld [vmem:[%s213 + $0x120] sm:$0xff]
        %v319 = vld [vmem:[%s213 + $0x128] sm:$0xff]
        %v320 = vld [vmem:[%s213 + $0x130] sm:$0xff]
        %v321 = vld [vmem:[%s213 + $0x138] sm:$0xff]
        %v322 = vld [vmem:[%s213 + $0x140] sm:$0xff]
        %v323 = vld [vmem:[%s213 + $0x148] sm:$0xff]
        %v324 = vld [vmem:[%s213 + $0x150] sm:$0xff]
        %v325 = vld [vmem:[%s213 + $0x158] sm:$0xff]
        %v326 = vld [vmem:[%s213 + $0x160] sm:$0xff]
        %v327 = vld [vmem:[%s213 + $0x168] sm:$0xff]
        %v328 = vld [vmem:[%s213 + $0x170] sm:$0xff]
        %v329 = vld [vmem:[%s213 + $0x178] sm:$0xff]
        %v330 = vld [vmem:[%s213 + $0x180] sm:$0xff]
        %v331 = vld [vmem:[%s213 + $0x188] sm:$0xff]
        %v332 = vld [vmem:[%s213 + $0x190] sm:$0xff]
        %v333 = vld [vmem:[%s213 + $0x198] sm:$0xff]
        %v334 = vld [vmem:[%s213 + $0x1a0] sm:$0xff]
        %v335 = vld [vmem:[%s213 + $0x1a8] sm:$0xff]
        %v336 = vld [vmem:[%s213 + $0x1b0] sm:$0xff]
        %v337 = vld [vmem:[%s213 + $0x1b8] sm:$0xff]
        %v338 = vld [vmem:[%s213 + $0x1c0] sm:$0xff]
        %v339 = vld [vmem:[%s213 + $0x1c8] sm:$0xff]
        %v340 = vld [vmem:[%s213 + $0x1d0] sm:$0xff]
        %v341 = vld [vmem:[%s213 + $0x1d8] sm:$0xff]
        %v342 = vld [vmem:[%s213 + $0x1e0] sm:$0xff]
        %v343 = vld [vmem:[%s213 + $0x1e8] sm:$0xff]
        %v344 = vld [vmem:[%s213 + $0x1f0] sm:$0xff]
        %v345 = vld [vmem:[%s213 + $0x1f8] sm:$0xff]
        %v346 = vld [vmem:[%s213 + $0x200] sm:$0xff]
        %v347 = vld [vmem:[%s213 + $0x208] sm:$0xff]
        %v348 = vld [vmem:[%s213 + $0x210] sm:$0xff]
        %v349 = vld [vmem:[%s213 + $0x218] sm:$0xff]
        %v350 = vld [vmem:[%s213 + $0x220] sm:$0xff]
        %v351 = vld [vmem:[%s213 + $0x228] sm:$0xff]
        %v352 = vld [vmem:[%s213 + $0x230] sm:$0xff]
        %v353 = vld [vmem:[%s213 + $0x238] sm:$0xff]
        %v354 = vld [vmem:[%s213 + $0x240] sm:$0xff]
        %v355 = vld [vmem:[%s213 + $0x248] sm:$0xff]
        %v356 = vld [vmem:[%s213 + $0x250] sm:$0xff]
        %v357 = vld [vmem:[%s213 + $0x258] sm:$0xff]
        %v358 = vld [vmem:[%s213 + $0x260] sm:$0xff]
        %v359 = vld [vmem:[%s213 + $0x268] sm:$0xff]
        %v360 = vld [vmem:[%s213 + $0x270] sm:$0xff]
        %v361 = vld [vmem:[%s213 + $0x278] sm:$0xff]
        %v362 = vld [vmem:[%s213 + $0x280] sm:$0xff]
        %v363 = vld [vmem:[%s213 + $0x288] sm:$0xff]
        %v364 = vld [vmem:[%s213 + $0x290] sm:$0xff]
        %v365 = vld [vmem:[%s213 + $0x298] sm:$0xff]
        %v366 = vld [vmem:[%s213 + $0x2a0] sm:$0xff]
        %v367 = vld [vmem:[%s213 + $0x2a8] sm:$0xff]
        %v368 = vld [vmem:[%s213 + $0x2b0] sm:$0xff]
        %v369 = vld [vmem:[%s213 + $0x2b8] sm:$0xff]
        %v370 = vld [vmem:[%s213 + $0x2c0] sm:$0xff]
        %v371 = vld [vmem:[%s213 + $0x2c8] sm:$0xff]
        %v372 = vld [vmem:[%s213 + $0x2d0] sm:$0xff]
        %v373 = vld [vmem:[%s213 + $0x2d8] sm:$0xff]
        %v374 = vld [vmem:[%s213 + $0x2e0] sm:$0xff]
        %v375 = vld [vmem:[%s213 + $0x2e8] sm:$0xff]
        %v376 = vld [vmem:[%s213 + $0x2f0] sm:$0xff]
        %v377 = vld [vmem:[%s213 + $0x2f8] sm:$0xff]
        %v378 = vld [vmem:[%s213 + $0x300] sm:$0xff]
        %v379 = vld [vmem:[%s213 + $0x308] sm:$0xff]
        %v380 = vld [vmem:[%s213 + $0x310] sm:$0xff]
        %v381 = vld [vmem:[%s213 + $0x318] sm:$0xff]
        %v382 = vld [vmem:[%s213 + $0x320] sm:$0xff]
        %v383 = vld [vmem:[%s213 + $0x328] sm:$0xff]
        %v384 = vld [vmem:[%s213 + $0x330] sm:$0xff]
        %v385 = vld [vmem:[%s213 + $0x338] sm:$0xff]
        %v386 = vld [vmem:[%s213 + $0x340] sm:$0xff]
        %v387 = vld [vmem:[%s213 + $0x348] sm:$0xff]
        %v388 = vld [vmem:[%s213 + $0x350] sm:$0xff]
        %v389 = vld [vmem:[%s213 + $0x358] sm:$0xff]
        %v390 = vld [vmem:[%s213 + $0x360] sm:$0xff]
        %v391 = vld [vmem:[%s213 + $0x368] sm:$0xff]
        %v392 = vld [vmem:[%s213 + $0x370] sm:$0xff]
        %v393 = vld [vmem:[%s213 + $0x378] sm:$0xff]
        %v394 = vld [vmem:[%s213 + $0x380] sm:$0xff]
        %v395 = vld [vmem:[%s213 + $0x388] sm:$0xff]
        %v396 = vld [vmem:[%s213 + $0x390] sm:$0xff]
        %v397 = vld [vmem:[%s213 + $0x398] sm:$0xff]
        %v398 = vld [vmem:[%s213 + $0x3a0] sm:$0xff]
        %v399 = vld [vmem:[%s213 + $0x3a8] sm:$0xff]
        %v400 = vld [vmem:[%s213 + $0x3b0] sm:$0xff]
        %v401 = vld [vmem:[%s213 + $0x3b8] sm:$0xff]
        %v402 = vld [vmem:[%s213 + $0x3c0] sm:$0xff]
        %v403 = vld [vmem:[%s213 + $0x3c8] sm:$0xff]
        %v404 = vld [vmem:[%s213 + $0x3d0] sm:$0xff]
        %v405 = vld [vmem:[%s213 + $0x3d8] sm:$0xff]
        %v406 = vld [vmem:[%s213 + $0x3e0] sm:$0xff]
        %v407 = vld [vmem:[%s213 + $0x3e8] sm:$0xff]
        %v408 = vld [vmem:[%s213 + $0x3f0] sm:$0xff]
        %v409 = vld [vmem:[%s213 + $0x3f8] sm:$0xff]
        %v410 = vld [vmem:[%s213 + $0x400] sm:$0xff]
        %v411 = vld [vmem:[%s213 + $0x408] sm:$0xff]
        %v412 = vld [vmem:[%s213 + $0x410] sm:$0xff]
        %v413 = vld [vmem:[%s213 + $0x418] sm:$0xff]
        %v414 = vld [vmem:[%s213 + $0x420] sm:$0xff]
        %v415 = vld [vmem:[%s213 + $0x428] sm:$0xff]
        %v416 = vld [vmem:[%s213 + $0x430] sm:$0xff]
        %v417 = vld [vmem:[%s213 + $0x438] sm:$0xff]
        %v418 = vld [vmem:[%s213 + $0x440] sm:$0xff]
        %v419 = vld [vmem:[%s213 + $0x448] sm:$0xff]
        %v420 = vld [vmem:[%s213 + $0x450] sm:$0xff]
        %v421 = vld [vmem:[%s213 + $0x458] sm:$0xff]
        %v422 = vld [vmem:[%s213 + $0x460] sm:$0xff]
        %v423 = vld [vmem:[%s213 + $0x468] sm:$0xff]
        %v424 = vld [vmem:[%s213 + $0x470] sm:$0xff]
        %v425 = vld [vmem:[%s213 + $0x478] sm:$0xff]
        %v426 = vld [vmem:[%s213 + $0x480] sm:$0xff]
        %v427 = vld [vmem:[%s213 + $0x488] sm:$0xff]
        %v428 = vld [vmem:[%s213 + $0x490] sm:$0xff]
        %v429 = vld [vmem:[%s213 + $0x498] sm:$0xff]
        %v430 = vld [vmem:[%s213 + $0x4a0] sm:$0xff]
        %v431 = vld [vmem:[%s213 + $0x4a8] sm:$0xff]
        %v432 = vld [vmem:[%s213 + $0x4b0] sm:$0xff]
        %v433 = vld [vmem:[%s213 + $0x4b8] sm:$0xff]
        %v434 = vld [vmem:[%s213 + $0x4c0] sm:$0xff]
        %v435 = vld [vmem:[%s213 + $0x4c8] sm:$0xff]
        %v436 = vld [vmem:[%s213 + $0x4d0] sm:$0xff]
        %v437 = vld [vmem:[%s213 + $0x4d8] sm:$0xff]
        %v438 = vld [vmem:[%s213 + $0x4e0] sm:$0xff]
        %v439 = vld [vmem:[%s213 + $0x4e8] sm:$0xff]
        %v440 = vld [vmem:[%s213 + $0x4f0] sm:$0xff]
        %v441 = vld [vmem:[%s213 + $0x4f8] sm:$0xff]
        %v442 = vld [vmem:[%s213 + $0x500] sm:$0xff]
        %v443 = vld [vmem:[%s213 + $0x508] sm:$0xff]
        %v444 = vld [vmem:[%s213 + $0x510] sm:$0xff]
        %v445 = vld [vmem:[%s213 + $0x518] sm:$0xff]
        %v446 = vld [vmem:[%s213 + $0x520] sm:$0xff]
        %v447 = vld [vmem:[%s213 + $0x528] sm:$0xff]
        %v448 = vld [vmem:[%s213 + $0x530] sm:$0xff]
        %v449 = vld [vmem:[%s213 + $0x538] sm:$0xff]
        %v450 = vld [vmem:[%s213 + $0x540] sm:$0xff]
        %v451 = vld [vmem:[%s213 + $0x548] sm:$0xff]
        %v452 = vld [vmem:[%s213 + $0x550] sm:$0xff]
        %v453 = vld [vmem:[%s213 + $0x558] sm:$0xff]
        %v454 = vld [vmem:[%s213 + $0x560] sm:$0xff]
        %v455 = vld [vmem:[%s213 + $0x568] sm:$0xff]
        %v456 = vld [vmem:[%s213 + $0x570] sm:$0xff]
        %v457 = vld [vmem:[%s213 + $0x578] sm:$0xff]
        %v458 = vld [vmem:[%s213 + $0x580] sm:$0xff]
        %v459 = vld [vmem:[%s213 + $0x588] sm:$0xff]
        %v460 = vld [vmem:[%s213 + $0x590] sm:$0xff]
        %v461 = vld [vmem:[%s213 + $0x598] sm:$0xff]
        %v462 = vld [vmem:[%s213 + $0x5a0] sm:$0xff]
        %v463 = vld [vmem:[%s213 + $0x5a8] sm:$0xff]
        %v464 = vld [vmem:[%s213 + $0x5b0] sm:$0xff]
        %v465 = vld [vmem:[%s213 + $0x5b8] sm:$0xff]
        %v466 = vld [vmem:[%s213 + $0x5c0] sm:$0xff]
        %v467 = vld [vmem:[%s213 + $0x5c8] sm:$0xff]
        %v468 = vld [vmem:[%s213 + $0x5d0] sm:$0xff]
        %v469 = vld [vmem:[%s213 + $0x5d8] sm:$0xff]
        %v470 = vld [vmem:[%s213 + $0x5e0] sm:$0xff]
        %v471 = vld [vmem:[%s213 + $0x5e8] sm:$0xff]
        %v472 = vld [vmem:[%s213 + $0x5f0] sm:$0xff]
        %v473 = vld [vmem:[%s213 + $0x5f8] sm:$0xff]
        %v474 = vld [vmem:[%s213 + $0x600] sm:$0xff]
        %v475 = vld [vmem:[%s213 + $0x608] sm:$0xff]
        %v476 = vld [vmem:[%s213 + $0x610] sm:$0xff]
        %v477 = vld [vmem:[%s213 + $0x618] sm:$0xff]
        %v478 = vld [vmem:[%s213 + $0x620] sm:$0xff]
        %v479 = vld [vmem:[%s213 + $0x628] sm:$0xff]
        %v480 = vld [vmem:[%s213 + $0x630] sm:$0xff]
        %v481 = vld [vmem:[%s213 + $0x638] sm:$0xff]
        %v482 = vld [vmem:[%s213 + $0x640] sm:$0xff]
        %v483 = vld [vmem:[%s213 + $0x648] sm:$0xff]
        %v484 = vld [vmem:[%s213 + $0x650] sm:$0xff]
        %v485 = vld [vmem:[%s213 + $0x658] sm:$0xff]
        %v486 = vld [vmem:[%s213 + $0x660] sm:$0xff]
        %v487 = vld [vmem:[%s213 + $0x668] sm:$0xff]
        %v488 = vld [vmem:[%s213 + $0x670] sm:$0xff]
        %v489 = vld [vmem:[%s213 + $0x678] sm:$0xff]
        %v490 = vld [vmem:[%s213 + $0x680] sm:$0xff]
        %v491 = vld [vmem:[%s213 + $0x688] sm:$0xff]
        %v492 = vld [vmem:[%s213 + $0x690] sm:$0xff]
        %v493 = vld [vmem:[%s213 + $0x698] sm:$0xff]
        %v494 = vld [vmem:[%s213 + $0x6a0] sm:$0xff]
        %v495 = vld [vmem:[%s213 + $0x6a8] sm:$0xff]
        %v496 = vld [vmem:[%s213 + $0x6b0] sm:$0xff]
        %v497 = vld [vmem:[%s213 + $0x6b8] sm:$0xff]
        %v498 = vld [vmem:[%s213 + $0x6c0] sm:$0xff]
        %v499 = vld [vmem:[%s213 + $0x6c8] sm:$0xff]
        %v500 = vld [vmem:[%s213 + $0x6d0] sm:$0xff]
        %v501 = vld [vmem:[%s213 + $0x6d8] sm:$0xff]
        %v502 = vld [vmem:[%s213 + $0x6e0] sm:$0xff]
        %v503 = vld [vmem:[%s213 + $0x6e8] sm:$0xff]
        %v504 = vld [vmem:[%s213 + $0x6f0] sm:$0xff]
        %v505 = vld [vmem:[%s213 + $0x6f8] sm:$0xff]
        %v506 = vld [vmem:[%s213 + $0x700] sm:$0xff]
        %v507 = vld [vmem:[%s213 + $0x708] sm:$0xff]
        %v508 = vld [vmem:[%s213 + $0x710] sm:$0xff]
        %v509 = vld [vmem:[%s213 + $0x718] sm:$0xff]
        %v510 = vld [vmem:[%s213 + $0x720] sm:$0xff]
        %v511 = vld [vmem:[%s213 + $0x728] sm:$0xff]
        %v512 = vld [vmem:[%s213 + $0x730] sm:$0xff]
        %v513 = vld [vmem:[%s213 + $0x738] sm:$0xff]
        %v514 = vld [vmem:[%s213 + $0x740] sm:$0xff]
        %v515 = vld [vmem:[%s213 + $0x748] sm:$0xff]
        %v516 = vld [vmem:[%s213 + $0x750] sm:$0xff]
        %v517 = vld [vmem:[%s213 + $0x758] sm:$0xff]
        %v518 = vld [vmem:[%s213 + $0x760] sm:$0xff]
        %v519 = vld [vmem:[%s213 + $0x768] sm:$0xff]
        %v520 = vld [vmem:[%s213 + $0x770] sm:$0xff]
        %v521 = vld [vmem:[%s213 + $0x778] sm:$0xff]
        %v522 = vld [vmem:[%s213 + $0x780] sm:$0xff]
        %v523 = vld [vmem:[%s213 + $0x788] sm:$0xff]
        %v524 = vld [vmem:[%s213 + $0x790] sm:$0xff]
        %v525 = vld [vmem:[%s213 + $0x798] sm:$0xff]
        %v526 = vld [vmem:[%s213 + $0x7a0] sm:$0xff]
        %v527 = vld [vmem:[%s213 + $0x7a8] sm:$0xff]
        %v528 = vld [vmem:[%s213 + $0x7b0] sm:$0xff]
        %v529 = vld [vmem:[%s213 + $0x7b8] sm:$0xff]
        %v530 = vld [vmem:[%s213 + $0x7c0] sm:$0xff]
        %v531 = vld [vmem:[%s213 + $0x7c8] sm:$0xff]
        %v532 = vld [vmem:[%s213 + $0x7d0] sm:$0xff]
        %v533 = vld [vmem:[%s213 + $0x7d8] sm:$0xff]
        %v534 = vld [vmem:[%s213 + $0x7e0] sm:$0xff]
        %v535 = vld [vmem:[%s213 + $0x7e8] sm:$0xff]
        %v536 = vld [vmem:[%s213 + $0x7f0] sm:$0xff]
        %v537 = vld [vmem:[%s213 + $0x7f8] sm:$0xff]
        %v538 = vld [vmem:[%s222] sm:$0x3]
        %v540 = vlaneseq
        %v541 = vshrl.u32 %v540, 7
        %v542 = vsub.s32 0, %v541
        %v543 = vrot.slane %v538, %v542
        %v544 = vlaneseq
        %v545 = vshrl.u32 %v544, 7
        %v546 = vsub.s32 1, %v545
        %v547 = vrot.slane %v538, %v546
        %v566 = vunpack.c.l.b16 %v266
        %v567 = vunpack.c.h.b16 %v266
        %v568 = vunpack.c.l.b16 %v267
        %v569 = vunpack.c.h.b16 %v267
        %v570 = vunpack.c.l.b16 %v268
        %v571 = vunpack.c.h.b16 %v268
        %v572 = vunpack.c.l.b16 %v269
        %v573 = vunpack.c.h.b16 %v269
        %v574 = vunpack.c.l.b16 %v270
        %v575 = vunpack.c.h.b16 %v270
        %v576 = vunpack.c.l.b16 %v271
        %v577 = vunpack.c.h.b16 %v271
        %v578 = vunpack.c.l.b16 %v272
        %v579 = vunpack.c.h.b16 %v272
        %v580 = vunpack.c.l.b16 %v273
        %v581 = vunpack.c.h.b16 %v273
        %v582 = vunpack.c.l.b16 %v274
        %v583 = vunpack.c.h.b16 %v274
        %v584 = vunpack.c.l.b16 %v275
        %v585 = vunpack.c.h.b16 %v275
        %v586 = vunpack.c.l.b16 %v276
        %v587 = vunpack.c.h.b16 %v276
        %v588 = vunpack.c.l.b16 %v277
        %v589 = vunpack.c.h.b16 %v277
        %v590 = vunpack.c.l.b16 %v278
        %v591 = vunpack.c.h.b16 %v278
        %v592 = vunpack.c.l.b16 %v279
        %v593 = vunpack.c.h.b16 %v279
        %v594 = vunpack.c.l.b16 %v280
        %v595 = vunpack.c.h.b16 %v280
        %v596 = vunpack.c.l.b16 %v281
        %v597 = vunpack.c.h.b16 %v281
        %v598 = vpack.c.b16 %v582, %v566
        %v599 = vpack.c.b16 %v583, %v567
        %v600 = vpack.c.b16 %v584, %v568
        %v601 = vpack.c.b16 %v585, %v569
        %v602 = vpack.c.b16 %v586, %v570
        %v603 = vpack.c.b16 %v587, %v571
        %v604 = vpack.c.b16 %v588, %v572
        %v605 = vpack.c.b16 %v589, %v573
        %v606 = vpack.c.b16 %v590, %v574
        %v607 = vpack.c.b16 %v591, %v575
        %v608 = vpack.c.b16 %v592, %v576
        %v609 = vpack.c.b16 %v593, %v577
        %v610 = vpack.c.b16 %v594, %v578
        %v611 = vpack.c.b16 %v595, %v579
        %v612 = vpack.c.b16 %v596, %v580
        %v613 = vpack.c.b16 %v597, %v581
        %v886 = vunpack.c.l.b16 %v282
        %v887 = vunpack.c.h.b16 %v282
        %v888 = vunpack.c.l.b16 %v283
        %v889 = vunpack.c.h.b16 %v283
        %v890 = vunpack.c.l.b16 %v284
        %v891 = vunpack.c.h.b16 %v284
        %v892 = vunpack.c.l.b16 %v285
        %v893 = vunpack.c.h.b16 %v285
        %v894 = vunpack.c.l.b16 %v286
        %v895 = vunpack.c.h.b16 %v286
        %v896 = vunpack.c.l.b16 %v287
        %v897 = vunpack.c.h.b16 %v287
        %v898 = vunpack.c.l.b16 %v288
        %v899 = vunpack.c.h.b16 %v288
        %v900 = vunpack.c.l.b16 %v289
        %v901 = vunpack.c.h.b16 %v289
        %v902 = vunpack.c.l.b16 %v290
        %v903 = vunpack.c.h.b16 %v290
        %v904 = vunpack.c.l.b16 %v291
        %v905 = vunpack.c.h.b16 %v291
        %v906 = vunpack.c.l.b16 %v292
        %v907 = vunpack.c.h.b16 %v292
        %v908 = vunpack.c.l.b16 %v293
        %v909 = vunpack.c.h.b16 %v293
        %v910 = vunpack.c.l.b16 %v294
        %v911 = vunpack.c.h.b16 %v294
        %v912 = vunpack.c.l.b16 %v295
        %v913 = vunpack.c.h.b16 %v295
        %v914 = vunpack.c.l.b16 %v296
        %v915 = vunpack.c.h.b16 %v296
        %v916 = vunpack.c.l.b16 %v297
        %v917 = vunpack.c.h.b16 %v297
        %v918 = vunpack.c.l.b16 %v298
        %v919 = vunpack.c.h.b16 %v298
        %v920 = vunpack.c.l.b16 %v299
        %v921 = vunpack.c.h.b16 %v299
        %v922 = vunpack.c.l.b16 %v300
        %v923 = vunpack.c.h.b16 %v300
        %v924 = vunpack.c.l.b16 %v301
        %v925 = vunpack.c.h.b16 %v301
        %v926 = vunpack.c.l.b16 %v302
        %v927 = vunpack.c.h.b16 %v302
        %v928 = vunpack.c.l.b16 %v303
        %v929 = vunpack.c.h.b16 %v303
        %v930 = vunpack.c.l.b16 %v304
        %v931 = vunpack.c.h.b16 %v304
        %v932 = vunpack.c.l.b16 %v305
        %v933 = vunpack.c.h.b16 %v305
        %v934 = vunpack.c.l.b16 %v306
        %v935 = vunpack.c.h.b16 %v306
        %v936 = vunpack.c.l.b16 %v307
        %v937 = vunpack.c.h.b16 %v307
        %v938 = vunpack.c.l.b16 %v308
        %v939 = vunpack.c.h.b16 %v308
        %v940 = vunpack.c.l.b16 %v309
        %v941 = vunpack.c.h.b16 %v309
        %v942 = vunpack.c.l.b16 %v310
        %v943 = vunpack.c.h.b16 %v310
        %v944 = vunpack.c.l.b16 %v311
        %v945 = vunpack.c.h.b16 %v311
        %v946 = vunpack.c.l.b16 %v312
        %v947 = vunpack.c.h.b16 %v312
        %v948 = vunpack.c.l.b16 %v313
        %v949 = vunpack.c.h.b16 %v313
        %v950 = vunpack.c.l.b16 %v314
        %v951 = vunpack.c.h.b16 %v314
        %v952 = vunpack.c.l.b16 %v315
        %v953 = vunpack.c.h.b16 %v315
        %v954 = vunpack.c.l.b16 %v316
        %v955 = vunpack.c.h.b16 %v316
        %v956 = vunpack.c.l.b16 %v317
        %v957 = vunpack.c.h.b16 %v317
        %v958 = vunpack.c.l.b16 %v318
        %v959 = vunpack.c.h.b16 %v318
        %v960 = vunpack.c.l.b16 %v319
        %v961 = vunpack.c.h.b16 %v319
        %v962 = vunpack.c.l.b16 %v320
        %v963 = vunpack.c.h.b16 %v320
        %v964 = vunpack.c.l.b16 %v321
        %v965 = vunpack.c.h.b16 %v321
        %v966 = vunpack.c.l.b16 %v322
        %v967 = vunpack.c.h.b16 %v322
        %v968 = vunpack.c.l.b16 %v323
        %v969 = vunpack.c.h.b16 %v323
        %v970 = vunpack.c.l.b16 %v324
        %v971 = vunpack.c.h.b16 %v324
        %v972 = vunpack.c.l.b16 %v325
        %v973 = vunpack.c.h.b16 %v325
        %v974 = vunpack.c.l.b16 %v326
        %v975 = vunpack.c.h.b16 %v326
        %v976 = vunpack.c.l.b16 %v327
        %v977 = vunpack.c.h.b16 %v327
        %v978 = vunpack.c.l.b16 %v328
        %v979 = vunpack.c.h.b16 %v328
        %v980 = vunpack.c.l.b16 %v329
        %v981 = vunpack.c.h.b16 %v329
        %v982 = vunpack.c.l.b16 %v330
        %v983 = vunpack.c.h.b16 %v330
        %v984 = vunpack.c.l.b16 %v331
        %v985 = vunpack.c.h.b16 %v331
        %v986 = vunpack.c.l.b16 %v332
        %v987 = vunpack.c.h.b16 %v332
        %v988 = vunpack.c.l.b16 %v333
        %v989 = vunpack.c.h.b16 %v333
        %v990 = vunpack.c.l.b16 %v334
        %v991 = vunpack.c.h.b16 %v334
        %v992 = vunpack.c.l.b16 %v335
        %v993 = vunpack.c.h.b16 %v335
        %v994 = vunpack.c.l.b16 %v336
        %v995 = vunpack.c.h.b16 %v336
        %v996 = vunpack.c.l.b16 %v337
        %v997 = vunpack.c.h.b16 %v337
        %v998 = vunpack.c.l.b16 %v338
        %v999 = vunpack.c.h.b16 %v338
        %v1000 = vunpack.c.l.b16 %v339
        %v1001 = vunpack.c.h.b16 %v339
        %v1002 = vunpack.c.l.b16 %v340
        %v1003 = vunpack.c.h.b16 %v340
        %v1004 = vunpack.c.l.b16 %v341
        %v1005 = vunpack.c.h.b16 %v341
        %v1006 = vunpack.c.l.b16 %v342
        %v1007 = vunpack.c.h.b16 %v342
        %v1008 = vunpack.c.l.b16 %v343
        %v1009 = vunpack.c.h.b16 %v343
        %v1010 = vunpack.c.l.b16 %v344
        %v1011 = vunpack.c.h.b16 %v344
        %v1012 = vunpack.c.l.b16 %v345
        %v1013 = vunpack.c.h.b16 %v345
        %v1014 = vunpack.c.l.b16 %v346
        %v1015 = vunpack.c.h.b16 %v346
        %v1016 = vunpack.c.l.b16 %v347
        %v1017 = vunpack.c.h.b16 %v347
        %v1018 = vunpack.c.l.b16 %v348
        %v1019 = vunpack.c.h.b16 %v348
        %v1020 = vunpack.c.l.b16 %v349
        %v1021 = vunpack.c.h.b16 %v349
        %v1022 = vunpack.c.l.b16 %v350
        %v1023 = vunpack.c.h.b16 %v350
        %v1024 = vunpack.c.l.b16 %v351
        %v1025 = vunpack.c.h.b16 %v351
        %v1026 = vunpack.c.l.b16 %v352
        %v1027 = vunpack.c.h.b16 %v352
        %v1028 = vunpack.c.l.b16 %v353
        %v1029 = vunpack.c.h.b16 %v353
        %v1030 = vunpack.c.l.b16 %v354
        %v1031 = vunpack.c.h.b16 %v354
        %v1032 = vunpack.c.l.b16 %v355
        %v1033 = vunpack.c.h.b16 %v355
        %v1034 = vunpack.c.l.b16 %v356
        %v1035 = vunpack.c.h.b16 %v356
        %v1036 = vunpack.c.l.b16 %v357
        %v1037 = vunpack.c.h.b16 %v357
        %v1038 = vunpack.c.l.b16 %v358
        %v1039 = vunpack.c.h.b16 %v358
        %v1040 = vunpack.c.l.b16 %v359
        %v1041 = vunpack.c.h.b16 %v359
        %v1042 = vunpack.c.l.b16 %v360
        %v1043 = vunpack.c.h.b16 %v360
        %v1044 = vunpack.c.l.b16 %v361
        %v1045 = vunpack.c.h.b16 %v361
        %v1046 = vunpack.c.l.b16 %v362
        %v1047 = vunpack.c.h.b16 %v362
        %v1048 = vunpack.c.l.b16 %v363
        %v1049 = vunpack.c.h.b16 %v363
        %v1050 = vunpack.c.l.b16 %v364
        %v1051 = vunpack.c.h.b16 %v364
        %v1052 = vunpack.c.l.b16 %v365
        %v1053 = vunpack.c.h.b16 %v365
        %v1054 = vunpack.c.l.b16 %v366
        %v1055 = vunpack.c.h.b16 %v366
        %v1056 = vunpack.c.l.b16 %v367
        %v1057 = vunpack.c.h.b16 %v367
        %v1058 = vunpack.c.l.b16 %v368
        %v1059 = vunpack.c.h.b16 %v368
        %v1060 = vunpack.c.l.b16 %v369
        %v1061 = vunpack.c.h.b16 %v369
        %v1062 = vunpack.c.l.b16 %v370
        %v1063 = vunpack.c.h.b16 %v370
        %v1064 = vunpack.c.l.b16 %v371
        %v1065 = vunpack.c.h.b16 %v371
        %v1066 = vunpack.c.l.b16 %v372
        %v1067 = vunpack.c.h.b16 %v372
        %v1068 = vunpack.c.l.b16 %v373
        %v1069 = vunpack.c.h.b16 %v373
        %v1070 = vunpack.c.l.b16 %v374
        %v1071 = vunpack.c.h.b16 %v374
        %v1072 = vunpack.c.l.b16 %v375
        %v1073 = vunpack.c.h.b16 %v375
        %v1074 = vunpack.c.l.b16 %v376
        %v1075 = vunpack.c.h.b16 %v376
        %v1076 = vunpack.c.l.b16 %v377
        %v1077 = vunpack.c.h.b16 %v377
        %v1078 = vunpack.c.l.b16 %v378
        %v1079 = vunpack.c.h.b16 %v378
        %v1080 = vunpack.c.l.b16 %v379
        %v1081 = vunpack.c.h.b16 %v379
        %v1082 = vunpack.c.l.b16 %v380
        %v1083 = vunpack.c.h.b16 %v380
        %v1084 = vunpack.c.l.b16 %v381
        %v1085 = vunpack.c.h.b16 %v381
        %v1086 = vunpack.c.l.b16 %v382
        %v1087 = vunpack.c.h.b16 %v382
        %v1088 = vunpack.c.l.b16 %v383
        %v1089 = vunpack.c.h.b16 %v383
        %v1090 = vunpack.c.l.b16 %v384
        %v1091 = vunpack.c.h.b16 %v384
        %v1092 = vunpack.c.l.b16 %v385
        %v1093 = vunpack.c.h.b16 %v385
        %v1094 = vunpack.c.l.b16 %v386
        %v1095 = vunpack.c.h.b16 %v386
        %v1096 = vunpack.c.l.b16 %v387
        %v1097 = vunpack.c.h.b16 %v387
        %v1098 = vunpack.c.l.b16 %v388
        %v1099 = vunpack.c.h.b16 %v388
        %v1100 = vunpack.c.l.b16 %v389
        %v1101 = vunpack.c.h.b16 %v389
        %v1102 = vunpack.c.l.b16 %v390
        %v1103 = vunpack.c.h.b16 %v390
        %v1104 = vunpack.c.l.b16 %v391
        %v1105 = vunpack.c.h.b16 %v391
        %v1106 = vunpack.c.l.b16 %v392
        %v1107 = vunpack.c.h.b16 %v392
        %v1108 = vunpack.c.l.b16 %v393
        %v1109 = vunpack.c.h.b16 %v393
        %v1110 = vunpack.c.l.b16 %v394
        %v1111 = vunpack.c.h.b16 %v394
        %v1112 = vunpack.c.l.b16 %v395
        %v1113 = vunpack.c.h.b16 %v395
        %v1114 = vunpack.c.l.b16 %v396
        %v1115 = vunpack.c.h.b16 %v396
        %v1116 = vunpack.c.l.b16 %v397
        %v1117 = vunpack.c.h.b16 %v397
        %v1118 = vunpack.c.l.b16 %v398
        %v1119 = vunpack.c.h.b16 %v398
        %v1120 = vunpack.c.l.b16 %v399
        %v1121 = vunpack.c.h.b16 %v399
        %v1122 = vunpack.c.l.b16 %v400
        %v1123 = vunpack.c.h.b16 %v400
        %v1124 = vunpack.c.l.b16 %v401
        %v1125 = vunpack.c.h.b16 %v401
        %v1126 = vunpack.c.l.b16 %v402
        %v1127 = vunpack.c.h.b16 %v402
        %v1128 = vunpack.c.l.b16 %v403
        %v1129 = vunpack.c.h.b16 %v403
        %v1130 = vunpack.c.l.b16 %v404
        %v1131 = vunpack.c.h.b16 %v404
        %v1132 = vunpack.c.l.b16 %v405
        %v1133 = vunpack.c.h.b16 %v405
        %v1134 = vunpack.c.l.b16 %v406
        %v1135 = vunpack.c.h.b16 %v406
        %v1136 = vunpack.c.l.b16 %v407
        %v1137 = vunpack.c.h.b16 %v407
        %v1138 = vunpack.c.l.b16 %v408
        %v1139 = vunpack.c.h.b16 %v408
        %v1140 = vunpack.c.l.b16 %v409
        %v1141 = vunpack.c.h.b16 %v409
        %v1142 = vunpack.c.l.b16 %v410
        %v1143 = vunpack.c.h.b16 %v410
        %v1144 = vunpack.c.l.b16 %v411
        %v1145 = vunpack.c.h.b16 %v411
        %v1146 = vunpack.c.l.b16 %v412
        %v1147 = vunpack.c.h.b16 %v412
        %v1148 = vunpack.c.l.b16 %v413
        %v1149 = vunpack.c.h.b16 %v413
        %v1150 = vunpack.c.l.b16 %v414
        %v1151 = vunpack.c.h.b16 %v414
        %v1152 = vunpack.c.l.b16 %v415
        %v1153 = vunpack.c.h.b16 %v415
        %v1154 = vunpack.c.l.b16 %v416
        %v1155 = vunpack.c.h.b16 %v416
        %v1156 = vunpack.c.l.b16 %v417
        %v1157 = vunpack.c.h.b16 %v417
        %v1158 = vunpack.c.l.b16 %v418
        %v1159 = vunpack.c.h.b16 %v418
        %v1160 = vunpack.c.l.b16 %v419
        %v1161 = vunpack.c.h.b16 %v419
        %v1162 = vunpack.c.l.b16 %v420
        %v1163 = vunpack.c.h.b16 %v420
        %v1164 = vunpack.c.l.b16 %v421
        %v1165 = vunpack.c.h.b16 %v421
        %v1166 = vunpack.c.l.b16 %v422
        %v1167 = vunpack.c.h.b16 %v422
        %v1168 = vunpack.c.l.b16 %v423
        %v1169 = vunpack.c.h.b16 %v423
        %v1170 = vunpack.c.l.b16 %v424
        %v1171 = vunpack.c.h.b16 %v424
        %v1172 = vunpack.c.l.b16 %v425
        %v1173 = vunpack.c.h.b16 %v425
        %v1174 = vunpack.c.l.b16 %v426
        %v1175 = vunpack.c.h.b16 %v426
        %v1176 = vunpack.c.l.b16 %v427
        %v1177 = vunpack.c.h.b16 %v427
        %v1178 = vunpack.c.l.b16 %v428
        %v1179 = vunpack.c.h.b16 %v428
        %v1180 = vunpack.c.l.b16 %v429
        %v1181 = vunpack.c.h.b16 %v429
        %v1182 = vunpack.c.l.b16 %v430
        %v1183 = vunpack.c.h.b16 %v430
        %v1184 = vunpack.c.l.b16 %v431
        %v1185 = vunpack.c.h.b16 %v431
        %v1186 = vunpack.c.l.b16 %v432
        %v1187 = vunpack.c.h.b16 %v432
        %v1188 = vunpack.c.l.b16 %v433
        %v1189 = vunpack.c.h.b16 %v433
        %v1190 = vunpack.c.l.b16 %v434
        %v1191 = vunpack.c.h.b16 %v434
        %v1192 = vunpack.c.l.b16 %v435
        %v1193 = vunpack.c.h.b16 %v435
        %v1194 = vunpack.c.l.b16 %v436
        %v1195 = vunpack.c.h.b16 %v436
        %v1196 = vunpack.c.l.b16 %v437
        %v1197 = vunpack.c.h.b16 %v437
        %v1198 = vunpack.c.l.b16 %v438
        %v1199 = vunpack.c.h.b16 %v438
        %v1200 = vunpack.c.l.b16 %v439
        %v1201 = vunpack.c.h.b16 %v439
        %v1202 = vunpack.c.l.b16 %v440
        %v1203 = vunpack.c.h.b16 %v440
        %v1204 = vunpack.c.l.b16 %v441
        %v1205 = vunpack.c.h.b16 %v441
        %v1206 = vunpack.c.l.b16 %v442
        %v1207 = vunpack.c.h.b16 %v442
        %v1208 = vunpack.c.l.b16 %v443
        %v1209 = vunpack.c.h.b16 %v443
        %v1210 = vunpack.c.l.b16 %v444
        %v1211 = vunpack.c.h.b16 %v444
        %v1212 = vunpack.c.l.b16 %v445
        %v1213 = vunpack.c.h.b16 %v445
        %v1214 = vunpack.c.l.b16 %v446
        %v1215 = vunpack.c.h.b16 %v446
        %v1216 = vunpack.c.l.b16 %v447
        %v1217 = vunpack.c.h.b16 %v447
        %v1218 = vunpack.c.l.b16 %v448
        %v1219 = vunpack.c.h.b16 %v448
        %v1220 = vunpack.c.l.b16 %v449
        %v1221 = vunpack.c.h.b16 %v449
        %v1222 = vunpack.c.l.b16 %v450
        %v1223 = vunpack.c.h.b16 %v450
        %v1224 = vunpack.c.l.b16 %v451
        %v1225 = vunpack.c.h.b16 %v451
        %v1226 = vunpack.c.l.b16 %v452
        %v1227 = vunpack.c.h.b16 %v452
        %v1228 = vunpack.c.l.b16 %v453
        %v1229 = vunpack.c.h.b16 %v453
        %v1230 = vunpack.c.l.b16 %v454
        %v1231 = vunpack.c.h.b16 %v454
        %v1232 = vunpack.c.l.b16 %v455
        %v1233 = vunpack.c.h.b16 %v455
        %v1234 = vunpack.c.l.b16 %v456
        %v1235 = vunpack.c.h.b16 %v456
        %v1236 = vunpack.c.l.b16 %v457
        %v1237 = vunpack.c.h.b16 %v457
        %v1238 = vunpack.c.l.b16 %v458
        %v1239 = vunpack.c.h.b16 %v458
        %v1240 = vunpack.c.l.b16 %v459
        %v1241 = vunpack.c.h.b16 %v459
        %v1242 = vunpack.c.l.b16 %v460
        %v1243 = vunpack.c.h.b16 %v460
        %v1244 = vunpack.c.l.b16 %v461
        %v1245 = vunpack.c.h.b16 %v461
        %v1246 = vunpack.c.l.b16 %v462
        %v1247 = vunpack.c.h.b16 %v462
        %v1248 = vunpack.c.l.b16 %v463
        %v1249 = vunpack.c.h.b16 %v463
        %v1250 = vunpack.c.l.b16 %v464
        %v1251 = vunpack.c.h.b16 %v464
        %v1252 = vunpack.c.l.b16 %v465
        %v1253 = vunpack.c.h.b16 %v465
        %v1254 = vunpack.c.l.b16 %v466
        %v1255 = vunpack.c.h.b16 %v466
        %v1256 = vunpack.c.l.b16 %v467
        %v1257 = vunpack.c.h.b16 %v467
        %v1258 = vunpack.c.l.b16 %v468
        %v1259 = vunpack.c.h.b16 %v468
        %v1260 = vunpack.c.l.b16 %v469
        %v1261 = vunpack.c.h.b16 %v469
        %v1262 = vunpack.c.l.b16 %v470
        %v1263 = vunpack.c.h.b16 %v470
        %v1264 = vunpack.c.l.b16 %v471
        %v1265 = vunpack.c.h.b16 %v471
        %v1266 = vunpack.c.l.b16 %v472
        %v1267 = vunpack.c.h.b16 %v472
        %v1268 = vunpack.c.l.b16 %v473
        %v1269 = vunpack.c.h.b16 %v473
        %v1270 = vunpack.c.l.b16 %v474
        %v1271 = vunpack.c.h.b16 %v474
        %v1272 = vunpack.c.l.b16 %v475
        %v1273 = vunpack.c.h.b16 %v475
        %v1274 = vunpack.c.l.b16 %v476
        %v1275 = vunpack.c.h.b16 %v476
        %v1276 = vunpack.c.l.b16 %v477
        %v1277 = vunpack.c.h.b16 %v477
        %v1278 = vunpack.c.l.b16 %v478
        %v1279 = vunpack.c.h.b16 %v478
        %v1280 = vunpack.c.l.b16 %v479
        %v1281 = vunpack.c.h.b16 %v479
        %v1282 = vunpack.c.l.b16 %v480
        %v1283 = vunpack.c.h.b16 %v480
        %v1284 = vunpack.c.l.b16 %v481
        %v1285 = vunpack.c.h.b16 %v481
        %v1286 = vunpack.c.l.b16 %v482
        %v1287 = vunpack.c.h.b16 %v482
        %v1288 = vunpack.c.l.b16 %v483
        %v1289 = vunpack.c.h.b16 %v483
        %v1290 = vunpack.c.l.b16 %v484
        %v1291 = vunpack.c.h.b16 %v484
        %v1292 = vunpack.c.l.b16 %v485
        %v1293 = vunpack.c.h.b16 %v485
        %v1294 = vunpack.c.l.b16 %v486
        %v1295 = vunpack.c.h.b16 %v486
        %v1296 = vunpack.c.l.b16 %v487
        %v1297 = vunpack.c.h.b16 %v487
        %v1298 = vunpack.c.l.b16 %v488
        %v1299 = vunpack.c.h.b16 %v488
        %v1300 = vunpack.c.l.b16 %v489
        %v1301 = vunpack.c.h.b16 %v489
        %v1302 = vunpack.c.l.b16 %v490
        %v1303 = vunpack.c.h.b16 %v490
        %v1304 = vunpack.c.l.b16 %v491
        %v1305 = vunpack.c.h.b16 %v491
        %v1306 = vunpack.c.l.b16 %v492
        %v1307 = vunpack.c.h.b16 %v492
        %v1308 = vunpack.c.l.b16 %v493
        %v1309 = vunpack.c.h.b16 %v493
        %v1310 = vunpack.c.l.b16 %v494
        %v1311 = vunpack.c.h.b16 %v494
        %v1312 = vunpack.c.l.b16 %v495
        %v1313 = vunpack.c.h.b16 %v495
        %v1314 = vunpack.c.l.b16 %v496
        %v1315 = vunpack.c.h.b16 %v496
        %v1316 = vunpack.c.l.b16 %v497
        %v1317 = vunpack.c.h.b16 %v497
        %v1318 = vunpack.c.l.b16 %v498
        %v1319 = vunpack.c.h.b16 %v498
        %v1320 = vunpack.c.l.b16 %v499
        %v1321 = vunpack.c.h.b16 %v499
        %v1322 = vunpack.c.l.b16 %v500
        %v1323 = vunpack.c.h.b16 %v500
        %v1324 = vunpack.c.l.b16 %v501
        %v1325 = vunpack.c.h.b16 %v501
        %v1326 = vunpack.c.l.b16 %v502
        %v1327 = vunpack.c.h.b16 %v502
        %v1328 = vunpack.c.l.b16 %v503
        %v1329 = vunpack.c.h.b16 %v503
        %v1330 = vunpack.c.l.b16 %v504
        %v1331 = vunpack.c.h.b16 %v504
        %v1332 = vunpack.c.l.b16 %v505
        %v1333 = vunpack.c.h.b16 %v505
        %v1334 = vunpack.c.l.b16 %v506
        %v1335 = vunpack.c.h.b16 %v506
        %v1336 = vunpack.c.l.b16 %v507
        %v1337 = vunpack.c.h.b16 %v507
        %v1338 = vunpack.c.l.b16 %v508
        %v1339 = vunpack.c.h.b16 %v508
        %v1340 = vunpack.c.l.b16 %v509
        %v1341 = vunpack.c.h.b16 %v509
        %v1342 = vunpack.c.l.b16 %v510
        %v1343 = vunpack.c.h.b16 %v510
        %v1344 = vunpack.c.l.b16 %v511
        %v1345 = vunpack.c.h.b16 %v511
        %v1346 = vunpack.c.l.b16 %v512
        %v1347 = vunpack.c.h.b16 %v512
        %v1348 = vunpack.c.l.b16 %v513
        %v1349 = vunpack.c.h.b16 %v513
        %v1350 = vunpack.c.l.b16 %v514
        %v1351 = vunpack.c.h.b16 %v514
        %v1352 = vunpack.c.l.b16 %v515
        %v1353 = vunpack.c.h.b16 %v515
        %v1354 = vunpack.c.l.b16 %v516
        %v1355 = vunpack.c.h.b16 %v516
        %v1356 = vunpack.c.l.b16 %v517
        %v1357 = vunpack.c.h.b16 %v517
        %v1358 = vunpack.c.l.b16 %v518
        %v1359 = vunpack.c.h.b16 %v518
        %v1360 = vunpack.c.l.b16 %v519
        %v1361 = vunpack.c.h.b16 %v519
        %v1362 = vunpack.c.l.b16 %v520
        %v1363 = vunpack.c.h.b16 %v520
        %v1364 = vunpack.c.l.b16 %v521
        %v1365 = vunpack.c.h.b16 %v521
        %v1366 = vunpack.c.l.b16 %v522
        %v1367 = vunpack.c.h.b16 %v522
        %v1368 = vunpack.c.l.b16 %v523
        %v1369 = vunpack.c.h.b16 %v523
        %v1370 = vunpack.c.l.b16 %v524
        %v1371 = vunpack.c.h.b16 %v524
        %v1372 = vunpack.c.l.b16 %v525
        %v1373 = vunpack.c.h.b16 %v525
        %v1374 = vunpack.c.l.b16 %v526
        %v1375 = vunpack.c.h.b16 %v526
        %v1376 = vunpack.c.l.b16 %v527
        %v1377 = vunpack.c.h.b16 %v527
        %v1378 = vunpack.c.l.b16 %v528
        %v1379 = vunpack.c.h.b16 %v528
        %v1380 = vunpack.c.l.b16 %v529
        %v1381 = vunpack.c.h.b16 %v529
        %v1382 = vunpack.c.l.b16 %v530
        %v1383 = vunpack.c.h.b16 %v530
        %v1384 = vunpack.c.l.b16 %v531
        %v1385 = vunpack.c.h.b16 %v531
        %v1386 = vunpack.c.l.b16 %v532
        %v1387 = vunpack.c.h.b16 %v532
        %v1388 = vunpack.c.l.b16 %v533
        %v1389 = vunpack.c.h.b16 %v533
        %v1390 = vunpack.c.l.b16 %v534
        %v1391 = vunpack.c.h.b16 %v534
        %v1392 = vunpack.c.l.b16 %v535
        %v1393 = vunpack.c.h.b16 %v535
        %v1394 = vunpack.c.l.b16 %v536
        %v1395 = vunpack.c.h.b16 %v536
        %v1396 = vunpack.c.l.b16 %v537
        %v1397 = vunpack.c.h.b16 %v537
        %v1398 = vpack.c.b16 %v888, %v886
        %v1399 = vpack.c.b16 %v889, %v887
        %v1400 = vpack.c.b16 %v892, %v890
        %v1401 = vpack.c.b16 %v893, %v891
        %v1402 = vpack.c.b16 %v896, %v894
        %v1403 = vpack.c.b16 %v897, %v895
        %v1404 = vpack.c.b16 %v900, %v898
        %v1405 = vpack.c.b16 %v901, %v899
        %v1406 = vpack.c.b16 %v904, %v902
        %v1407 = vpack.c.b16 %v905, %v903
        %v1408 = vpack.c.b16 %v908, %v906
        %v1409 = vpack.c.b16 %v909, %v907
        %v1410 = vpack.c.b16 %v912, %v910
        %v1411 = vpack.c.b16 %v913, %v911
        %v1412 = vpack.c.b16 %v916, %v914
        %v1413 = vpack.c.b16 %v917, %v915
        %v1414 = vpack.c.b16 %v920, %v918
        %v1415 = vpack.c.b16 %v921, %v919
        %v1416 = vpack.c.b16 %v924, %v922
        %v1417 = vpack.c.b16 %v925, %v923
        %v1418 = vpack.c.b16 %v928, %v926
        %v1419 = vpack.c.b16 %v929, %v927
        %v1420 = vpack.c.b16 %v932, %v930
        %v1421 = vpack.c.b16 %v933, %v931
        %v1422 = vpack.c.b16 %v936, %v934
        %v1423 = vpack.c.b16 %v937, %v935
        %v1424 = vpack.c.b16 %v940, %v938
        %v1425 = vpack.c.b16 %v941, %v939
        %v1426 = vpack.c.b16 %v944, %v942
        %v1427 = vpack.c.b16 %v945, %v943
        %v1428 = vpack.c.b16 %v948, %v946
        %v1429 = vpack.c.b16 %v949, %v947
        %v1430 = vpack.c.b16 %v952, %v950
        %v1431 = vpack.c.b16 %v953, %v951
        %v1432 = vpack.c.b16 %v956, %v954
        %v1433 = vpack.c.b16 %v957, %v955
        %v1434 = vpack.c.b16 %v960, %v958
        %v1435 = vpack.c.b16 %v961, %v959
        %v1436 = vpack.c.b16 %v964, %v962
        %v1437 = vpack.c.b16 %v965, %v963
        %v1438 = vpack.c.b16 %v968, %v966
        %v1439 = vpack.c.b16 %v969, %v967
        %v1440 = vpack.c.b16 %v972, %v970
        %v1441 = vpack.c.b16 %v973, %v971
        %v1442 = vpack.c.b16 %v976, %v974
        %v1443 = vpack.c.b16 %v977, %v975
        %v1444 = vpack.c.b16 %v980, %v978
        %v1445 = vpack.c.b16 %v981, %v979
        %v1446 = vpack.c.b16 %v984, %v982
        %v1447 = vpack.c.b16 %v985, %v983
        %v1448 = vpack.c.b16 %v988, %v986
        %v1449 = vpack.c.b16 %v989, %v987
        %v1450 = vpack.c.b16 %v992, %v990
        %v1451 = vpack.c.b16 %v993, %v991
        %v1452 = vpack.c.b16 %v996, %v994
        %v1453 = vpack.c.b16 %v997, %v995
        %v1454 = vpack.c.b16 %v1000, %v998
        %v1455 = vpack.c.b16 %v1001, %v999
        %v1456 = vpack.c.b16 %v1004, %v1002
        %v1457 = vpack.c.b16 %v1005, %v1003
        %v1458 = vpack.c.b16 %v1008, %v1006
        %v1459 = vpack.c.b16 %v1009, %v1007
        %v1460 = vpack.c.b16 %v1012, %v1010
        %v1461 = vpack.c.b16 %v1013, %v1011
        %v1462 = vpack.c.b16 %v1016, %v1014
        %v1463 = vpack.c.b16 %v1017, %v1015
        %v1464 = vpack.c.b16 %v1020, %v1018
        %v1465 = vpack.c.b16 %v1021, %v1019
        %v1466 = vpack.c.b16 %v1024, %v1022
        %v1467 = vpack.c.b16 %v1025, %v1023
        %v1468 = vpack.c.b16 %v1028, %v1026
        %v1469 = vpack.c.b16 %v1029, %v1027
        %v1470 = vpack.c.b16 %v1032, %v1030
        %v1471 = vpack.c.b16 %v1033, %v1031
        %v1472 = vpack.c.b16 %v1036, %v1034
        %v1473 = vpack.c.b16 %v1037, %v1035
        %v1474 = vpack.c.b16 %v1040, %v1038
        %v1475 = vpack.c.b16 %v1041, %v1039
        %v1476 = vpack.c.b16 %v1044, %v1042
        %v1477 = vpack.c.b16 %v1045, %v1043
        %v1478 = vpack.c.b16 %v1048, %v1046
        %v1479 = vpack.c.b16 %v1049, %v1047
        %v1480 = vpack.c.b16 %v1052, %v1050
        %v1481 = vpack.c.b16 %v1053, %v1051
        %v1482 = vpack.c.b16 %v1056, %v1054
        %v1483 = vpack.c.b16 %v1057, %v1055
        %v1484 = vpack.c.b16 %v1060, %v1058
        %v1485 = vpack.c.b16 %v1061, %v1059
        %v1486 = vpack.c.b16 %v1064, %v1062
        %v1487 = vpack.c.b16 %v1065, %v1063
        %v1488 = vpack.c.b16 %v1068, %v1066
        %v1489 = vpack.c.b16 %v1069, %v1067
        %v1490 = vpack.c.b16 %v1072, %v1070
        %v1491 = vpack.c.b16 %v1073, %v1071
        %v1492 = vpack.c.b16 %v1076, %v1074
        %v1493 = vpack.c.b16 %v1077, %v1075
        %v1494 = vpack.c.b16 %v1080, %v1078
        %v1495 = vpack.c.b16 %v1081, %v1079
        %v1496 = vpack.c.b16 %v1084, %v1082
        %v1497 = vpack.c.b16 %v1085, %v1083
        %v1498 = vpack.c.b16 %v1088, %v1086
        %v1499 = vpack.c.b16 %v1089, %v1087
        %v1500 = vpack.c.b16 %v1092, %v1090
        %v1501 = vpack.c.b16 %v1093, %v1091
        %v1502 = vpack.c.b16 %v1096, %v1094
        %v1503 = vpack.c.b16 %v1097, %v1095
        %v1504 = vpack.c.b16 %v1100, %v1098
        %v1505 = vpack.c.b16 %v1101, %v1099
        %v1506 = vpack.c.b16 %v1104, %v1102
        %v1507 = vpack.c.b16 %v1105, %v1103
        %v1508 = vpack.c.b16 %v1108, %v1106
        %v1509 = vpack.c.b16 %v1109, %v1107
        %v1510 = vpack.c.b16 %v1112, %v1110
        %v1511 = vpack.c.b16 %v1113, %v1111
        %v1512 = vpack.c.b16 %v1116, %v1114
        %v1513 = vpack.c.b16 %v1117, %v1115
        %v1514 = vpack.c.b16 %v1120, %v1118
        %v1515 = vpack.c.b16 %v1121, %v1119
        %v1516 = vpack.c.b16 %v1124, %v1122
        %v1517 = vpack.c.b16 %v1125, %v1123
        %v1518 = vpack.c.b16 %v1128, %v1126
        %v1519 = vpack.c.b16 %v1129, %v1127
        %v1520 = vpack.c.b16 %v1132, %v1130
        %v1521 = vpack.c.b16 %v1133, %v1131
        %v1522 = vpack.c.b16 %v1136, %v1134
        %v1523 = vpack.c.b16 %v1137, %v1135
        %v1524 = vpack.c.b16 %v1140, %v1138
        %v1525 = vpack.c.b16 %v1141, %v1139
        %v1526 = vpack.c.b16 %v1144, %v1142
        %v1527 = vpack.c.b16 %v1145, %v1143
        %v1528 = vpack.c.b16 %v1148, %v1146
        %v1529 = vpack.c.b16 %v1149, %v1147
        %v1530 = vpack.c.b16 %v1152, %v1150
        %v1531 = vpack.c.b16 %v1153, %v1151
        %v1532 = vpack.c.b16 %v1156, %v1154
        %v1533 = vpack.c.b16 %v1157, %v1155
        %v1534 = vpack.c.b16 %v1160, %v1158
        %v1535 = vpack.c.b16 %v1161, %v1159
        %v1536 = vpack.c.b16 %v1164, %v1162
        %v1537 = vpack.c.b16 %v1165, %v1163
        %v1538 = vpack.c.b16 %v1168, %v1166
        %v1539 = vpack.c.b16 %v1169, %v1167
        %v1540 = vpack.c.b16 %v1172, %v1170
        %v1541 = vpack.c.b16 %v1173, %v1171
        %v1542 = vpack.c.b16 %v1176, %v1174
        %v1543 = vpack.c.b16 %v1177, %v1175
        %v1544 = vpack.c.b16 %v1180, %v1178
        %v1545 = vpack.c.b16 %v1181, %v1179
        %v1546 = vpack.c.b16 %v1184, %v1182
        %v1547 = vpack.c.b16 %v1185, %v1183
        %v1548 = vpack.c.b16 %v1188, %v1186
        %v1549 = vpack.c.b16 %v1189, %v1187
        %v1550 = vpack.c.b16 %v1192, %v1190
        %v1551 = vpack.c.b16 %v1193, %v1191
        %v1552 = vpack.c.b16 %v1196, %v1194
        %v1553 = vpack.c.b16 %v1197, %v1195
        %v1554 = vpack.c.b16 %v1200, %v1198
        %v1555 = vpack.c.b16 %v1201, %v1199
        %v1556 = vpack.c.b16 %v1204, %v1202
        %v1557 = vpack.c.b16 %v1205, %v1203
        %v1558 = vpack.c.b16 %v1208, %v1206
        %v1559 = vpack.c.b16 %v1209, %v1207
        %v1560 = vpack.c.b16 %v1212, %v1210
        %v1561 = vpack.c.b16 %v1213, %v1211
        %v1562 = vpack.c.b16 %v1216, %v1214
        %v1563 = vpack.c.b16 %v1217, %v1215
        %v1564 = vpack.c.b16 %v1220, %v1218
        %v1565 = vpack.c.b16 %v1221, %v1219
        %v1566 = vpack.c.b16 %v1224, %v1222
        %v1567 = vpack.c.b16 %v1225, %v1223
        %v1568 = vpack.c.b16 %v1228, %v1226
        %v1569 = vpack.c.b16 %v1229, %v1227
        %v1570 = vpack.c.b16 %v1232, %v1230
        %v1571 = vpack.c.b16 %v1233, %v1231
        %v1572 = vpack.c.b16 %v1236, %v1234
        %v1573 = vpack.c.b16 %v1237, %v1235
        %v1574 = vpack.c.b16 %v1240, %v1238
        %v1575 = vpack.c.b16 %v1241, %v1239
        %v1576 = vpack.c.b16 %v1244, %v1242
        %v1577 = vpack.c.b16 %v1245, %v1243
        %v1578 = vpack.c.b16 %v1248, %v1246
        %v1579 = vpack.c.b16 %v1249, %v1247
        %v1580 = vpack.c.b16 %v1252, %v1250
        %v1581 = vpack.c.b16 %v1253, %v1251
        %v1582 = vpack.c.b16 %v1256, %v1254
        %v1583 = vpack.c.b16 %v1257, %v1255
        %v1584 = vpack.c.b16 %v1260, %v1258
        %v1585 = vpack.c.b16 %v1261, %v1259
        %v1586 = vpack.c.b16 %v1264, %v1262
        %v1587 = vpack.c.b16 %v1265, %v1263
        %v1588 = vpack.c.b16 %v1268, %v1266
        %v1589 = vpack.c.b16 %v1269, %v1267
        %v1590 = vpack.c.b16 %v1272, %v1270
        %v1591 = vpack.c.b16 %v1273, %v1271
        %v1592 = vpack.c.b16 %v1276, %v1274
        %v1593 = vpack.c.b16 %v1277, %v1275
        %v1594 = vpack.c.b16 %v1280, %v1278
        %v1595 = vpack.c.b16 %v1281, %v1279
        %v1596 = vpack.c.b16 %v1284, %v1282
        %v1597 = vpack.c.b16 %v1285, %v1283
        %v1598 = vpack.c.b16 %v1288, %v1286
        %v1599 = vpack.c.b16 %v1289, %v1287
        %v1600 = vpack.c.b16 %v1292, %v1290
        %v1601 = vpack.c.b16 %v1293, %v1291
        %v1602 = vpack.c.b16 %v1296, %v1294
        %v1603 = vpack.c.b16 %v1297, %v1295
        %v1604 = vpack.c.b16 %v1300, %v1298
        %v1605 = vpack.c.b16 %v1301, %v1299
        %v1606 = vpack.c.b16 %v1304, %v1302
        %v1607 = vpack.c.b16 %v1305, %v1303
        %v1608 = vpack.c.b16 %v1308, %v1306
        %v1609 = vpack.c.b16 %v1309, %v1307
        %v1610 = vpack.c.b16 %v1312, %v1310
        %v1611 = vpack.c.b16 %v1313, %v1311
        %v1612 = vpack.c.b16 %v1316, %v1314
        %v1613 = vpack.c.b16 %v1317, %v1315
        %v1614 = vpack.c.b16 %v1320, %v1318
        %v1615 = vpack.c.b16 %v1321, %v1319
        %v1616 = vpack.c.b16 %v1324, %v1322
        %v1617 = vpack.c.b16 %v1325, %v1323
        %v1618 = vpack.c.b16 %v1328, %v1326
        %v1619 = vpack.c.b16 %v1329, %v1327
        %v1620 = vpack.c.b16 %v1332, %v1330
        %v1621 = vpack.c.b16 %v1333, %v1331
        %v1622 = vpack.c.b16 %v1336, %v1334
        %v1623 = vpack.c.b16 %v1337, %v1335
        %v1624 = vpack.c.b16 %v1340, %v1338
        %v1625 = vpack.c.b16 %v1341, %v1339
        %v1626 = vpack.c.b16 %v1344, %v1342
        %v1627 = vpack.c.b16 %v1345, %v1343
        %v1628 = vpack.c.b16 %v1348, %v1346
        %v1629 = vpack.c.b16 %v1349, %v1347
        %v1630 = vpack.c.b16 %v1352, %v1350
        %v1631 = vpack.c.b16 %v1353, %v1351
        %v1632 = vpack.c.b16 %v1356, %v1354
        %v1633 = vpack.c.b16 %v1357, %v1355
        %v1634 = vpack.c.b16 %v1360, %v1358
        %v1635 = vpack.c.b16 %v1361, %v1359
        %v1636 = vpack.c.b16 %v1364, %v1362
        %v1637 = vpack.c.b16 %v1365, %v1363
        %v1638 = vpack.c.b16 %v1368, %v1366
        %v1639 = vpack.c.b16 %v1369, %v1367
        %v1640 = vpack.c.b16 %v1372, %v1370
        %v1641 = vpack.c.b16 %v1373, %v1371
        %v1642 = vpack.c.b16 %v1376, %v1374
        %v1643 = vpack.c.b16 %v1377, %v1375
        %v1644 = vpack.c.b16 %v1380, %v1378
        %v1645 = vpack.c.b16 %v1381, %v1379
        %v1646 = vpack.c.b16 %v1384, %v1382
        %v1647 = vpack.c.b16 %v1385, %v1383
        %v1648 = vpack.c.b16 %v1388, %v1386
        %v1649 = vpack.c.b16 %v1389, %v1387
        %v1650 = vpack.c.b16 %v1392, %v1390
        %v1651 = vpack.c.b16 %v1393, %v1391
        %v1652 = vpack.c.b16 %v1396, %v1394
        %v1653 = vpack.c.b16 %v1397, %v1395
        %1910 = vmatprep.subr.bf16.mxu0 %v1399
        %1911 = vmatpush1.bf16.msra.mxu0 %v1398
        %1912 = vmatprep.subr.bf16.mxu0 %v1401
        %1913 = vmatpush1.bf16.msra.mxu0 %v1400
        %1914 = vmatprep.subr.bf16.mxu0 %v1403
        %1915 = vmatpush1.bf16.msra.mxu0 %v1402
        %1916 = vmatprep.subr.bf16.mxu0 %v1405
        %1917 = vmatpush1.bf16.msra.mxu0 %v1404
        %1918 = vmatprep.subr.bf16.mxu0 %v1407
        %1919 = vmatpush1.bf16.msra.mxu0 %v1406
        %1920 = vmatprep.subr.bf16.mxu0 %v1409
        %1921 = vmatpush1.bf16.msra.mxu0 %v1408
        %1922 = vmatprep.subr.bf16.mxu0 %v1411
        %1923 = vmatpush1.bf16.msra.mxu0 %v1410
        %1924 = vmatprep.subr.bf16.mxu0 %v1413
        %1925 = vmatpush1.bf16.msra.mxu0 %v1412
        %1926 = vmatprep.subr.bf16.mxu0 %v1415
        %1927 = vmatpush1.bf16.msra.mxu0 %v1414
        %1928 = vmatprep.subr.bf16.mxu0 %v1417
        %1929 = vmatpush1.bf16.msra.mxu0 %v1416
        %1930 = vmatprep.subr.bf16.mxu0 %v1419
        %1931 = vmatpush1.bf16.msra.mxu0 %v1418
        %1932 = vmatprep.subr.bf16.mxu0 %v1421
        %1933 = vmatpush1.bf16.msra.mxu0 %v1420
        %1934 = vmatprep.subr.bf16.mxu0 %v1423
        %1935 = vmatpush1.bf16.msra.mxu0 %v1422
        %1936 = vmatprep.subr.bf16.mxu0 %v1425
        %1937 = vmatpush1.bf16.msra.mxu0 %v1424
        %1938 = vmatprep.subr.bf16.mxu0 %v1427
        %1939 = vmatpush1.bf16.msra.mxu0 %v1426
        %1940 = vmatprep.subr.bf16.mxu0 %v1429
        %1941 = vmatpush1.bf16.msra.mxu0 %v1428
        %1942 = vmatprep.mubr.bf16.mxu0 %v599
        %1943 = vmatmul.mubr.bf16.gmra.mrb[0].mxu0 %v598
        %v1944 = vpop.f32.mrb[0].mxu0
        %v1945 = vadd.f32 %v543, %v1944
        %v1946 = vpop.f32.mrb[0].mxu0
        %v1947 = vadd.f32 %v547, %v1946
        %v1948 = vpop.f32.mrb[0].mxu0
        %v1949 = vadd.f32 %v543, %v1948
        %v1950 = vpop.f32.mrb[0].mxu0
        %v1951 = vadd.f32 %v547, %v1950
        %1952 = vdwg.mxu0
        %1953 = vmatprep.subr.bf16.mxu0 %v1431
        %1954 = vmatpush1.bf16.msra.mxu0 %v1430
        %1955 = vmatprep.subr.bf16.mxu0 %v1433
        %1956 = vmatpush1.bf16.msra.mxu0 %v1432
        %1957 = vmatprep.subr.bf16.mxu0 %v1435
        %1958 = vmatpush1.bf16.msra.mxu0 %v1434
        %1959 = vmatprep.subr.bf16.mxu0 %v1437
        %1960 = vmatpush1.bf16.msra.mxu0 %v1436
        %1961 = vmatprep.subr.bf16.mxu0 %v1439
        %1962 = vmatpush1.bf16.msra.mxu0 %v1438
        %1963 = vmatprep.subr.bf16.mxu0 %v1441
        %1964 = vmatpush1.bf16.msra.mxu0 %v1440
        %1965 = vmatprep.subr.bf16.mxu0 %v1443
        %1966 = vmatpush1.bf16.msra.mxu0 %v1442
        %1967 = vmatprep.subr.bf16.mxu0 %v1445
        %1968 = vmatpush1.bf16.msra.mxu0 %v1444
        %1969 = vmatprep.subr.bf16.mxu0 %v1447
        %1970 = vmatpush1.bf16.msra.mxu0 %v1446
        %1971 = vmatprep.subr.bf16.mxu0 %v1449
        %1972 = vmatpush1.bf16.msra.mxu0 %v1448
        %1973 = vmatprep.subr.bf16.mxu0 %v1451
        %1974 = vmatpush1.bf16.msra.mxu0 %v1450
        %1975 = vmatprep.subr.bf16.mxu0 %v1453
        %1976 = vmatpush1.bf16.msra.mxu0 %v1452
        %1977 = vmatprep.subr.bf16.mxu0 %v1455
        %1978 = vmatpush1.bf16.msra.mxu0 %v1454
        %1979 = vmatprep.subr.bf16.mxu0 %v1457
        %1980 = vmatpush1.bf16.msra.mxu0 %v1456
        %1981 = vmatprep.subr.bf16.mxu0 %v1459
        %1982 = vmatpush1.bf16.msra.mxu0 %v1458
        %1983 = vmatprep.subr.bf16.mxu0 %v1461
        %1984 = vmatpush1.bf16.msra.mxu0 %v1460
        %1985 = vmatprep.mubr.bf16.mxu0 %v601
        %1986 = vmatmul.mubr.bf16.gmra.mrb[0].mxu0 %v600
        %v1987 = vpop.f32.mrb[0].mxu0
        %v1988 = vadd.f32 %v1945, %v1987
        %v1989 = vpop.f32.mrb[0].mxu0
        %v1990 = vadd.f32 %v1947, %v1989
        %v1991 = vpop.f32.mrb[0].mxu0
        %v1992 = vadd.f32 %v1949, %v1991
        %v1993 = vpop.f32.mrb[0].mxu0
        %v1994 = vadd.f32 %v1951, %v1993
        %1995 = vdwg.mxu0
        %1996 = vmatprep.subr.bf16.mxu0 %v1463
        %1997 = vmatpush1.bf16.msra.mxu0 %v1462
        %1998 = vmatprep.subr.bf16.mxu0 %v1465
        %1999 = vmatpush1.bf16.msra.mxu0 %v1464
        %2000 = vmatprep.subr.bf16.mxu0 %v1467
        %2001 = vmatpush1.bf16.msra.mxu0 %v1466
        %2002 = vmatprep.subr.bf16.mxu0 %v1469
        %2003 = vmatpush1.bf16.msra.mxu0 %v1468
        %2004 = vmatprep.subr.bf16.mxu0 %v1471
        %2005 = vmatpush1.bf16.msra.mxu0 %v1470
        %2006 = vmatprep.subr.bf16.mxu0 %v1473
        %2007 = vmatpush1.bf16.msra.mxu0 %v1472
        %2008 = vmatprep.subr.bf16.mxu0 %v1475
        %2009 = vmatpush1.bf16.msra.mxu0 %v1474
        %2010 = vmatprep.subr.bf16.mxu0 %v1477
        %2011 = vmatpush1.bf16.msra.mxu0 %v1476
        %2012 = vmatprep.subr.bf16.mxu0 %v1479
        %2013 = vmatpush1.bf16.msra.mxu0 %v1478
        %2014 = vmatprep.subr.bf16.mxu0 %v1481
        %2015 = vmatpush1.bf16.msra.mxu0 %v1480
        %2016 = vmatprep.subr.bf16.mxu0 %v1483
        %2017 = vmatpush1.bf16.msra.mxu0 %v1482
        %2018 = vmatprep.subr.bf16.mxu0 %v1485
        %2019 = vmatpush1.bf16.msra.mxu0 %v1484
        %2020 = vmatprep.subr.bf16.mxu0 %v1487
        %2021 = vmatpush1.bf16.msra.mxu0 %v1486
        %2022 = vmatprep.subr.bf16.mxu0 %v1489
        %2023 = vmatpush1.bf16.msra.mxu0 %v1488
        %2024 = vmatprep.subr.bf16.mxu0 %v1491
        %2025 = vmatpush1.bf16.msra.mxu0 %v1490
        %2026 = vmatprep.subr.bf16.mxu0 %v1493
        %2027 = vmatpush1.bf16.msra.mxu0 %v1492
        %2028 = vmatprep.mubr.bf16.mxu0 %v603
        %2029 = vmatmul.mubr.bf16.gmra.mrb[0].mxu0 %v602
        %v2030 = vpop.f32.mrb[0].mxu0
        %v2031 = vadd.f32 %v1988, %v2030
        %v2032 = vpop.f32.mrb[0].mxu0
        %v2033 = vadd.f32 %v1990, %v2032
        %v2034 = vpop.f32.mrb[0].mxu0
        %v2035 = vadd.f32 %v1992, %v2034
        %v2036 = vpop.f32.mrb[0].mxu0
        %v2037 = vadd.f32 %v1994, %v2036
        %2038 = vdwg.mxu0
        %2039 = vmatprep.subr.bf16.mxu0 %v1495
        %2040 = vmatpush1.bf16.msra.mxu0 %v1494
        %2041 = vmatprep.subr.bf16.mxu0 %v1497
        %2042 = vmatpush1.bf16.msra.mxu0 %v1496
        %2043 = vmatprep.subr.bf16.mxu0 %v1499
        %2044 = vmatpush1.bf16.msra.mxu0 %v1498
        %2045 = vmatprep.subr.bf16.mxu0 %v1501
        %2046 = vmatpush1.bf16.msra.mxu0 %v1500
        %2047 = vmatprep.subr.bf16.mxu0 %v1503
        %2048 = vmatpush1.bf16.msra.mxu0 %v1502
        %2049 = vmatprep.subr.bf16.mxu0 %v1505
        %2050 = vmatpush1.bf16.msra.mxu0 %v1504
        %2051 = vmatprep.subr.bf16.mxu0 %v1507
        %2052 = vmatpush1.bf16.msra.mxu0 %v1506
        %2053 = vmatprep.subr.bf16.mxu0 %v1509
        %2054 = vmatpush1.bf16.msra.mxu0 %v1508
        %2055 = vmatprep.subr.bf16.mxu0 %v1511
        %2056 = vmatpush1.bf16.msra.mxu0 %v1510
        %2057 = vmatprep.subr.bf16.mxu0 %v1513
        %2058 = vmatpush1.bf16.msra.mxu0 %v1512
        %2059 = vmatprep.subr.bf16.mxu0 %v1515
        %2060 = vmatpush1.bf16.msra.mxu0 %v1514
        %2061 = vmatprep.subr.bf16.mxu0 %v1517
        %2062 = vmatpush1.bf16.msra.mxu0 %v1516
        %2063 = vmatprep.subr.bf16.mxu0 %v1519
        %2064 = vmatpush1.bf16.msra.mxu0 %v1518
        %2065 = vmatprep.subr.bf16.mxu0 %v1521
        %2066 = vmatpush1.bf16.msra.mxu0 %v1520
        %2067 = vmatprep.subr.bf16.mxu0 %v1523
        %2068 = vmatpush1.bf16.msra.mxu0 %v1522
        %2069 = vmatprep.subr.bf16.mxu0 %v1525
        %2070 = vmatpush1.bf16.msra.mxu0 %v1524
        %2071 = vmatprep.mubr.bf16.mxu0 %v605
        %2072 = vmatmul.mubr.bf16.gmra.mrb[0].mxu0 %v604
        %v2073 = vpop.f32.mrb[0].mxu0
        %v2074 = vadd.f32 %v2031, %v2073
        %v2075 = vpop.f32.mrb[0].mxu0
        %v2076 = vadd.f32 %v2033, %v2075
        %v2077 = vpop.f32.mrb[0].mxu0
        %v2078 = vadd.f32 %v2035, %v2077
        %v2079 = vpop.f32.mrb[0].mxu0
        %v2080 = vadd.f32 %v2037, %v2079
        %2081 = vdwg.mxu0
        %2082 = vmatprep.subr.bf16.mxu0 %v1527
        %2083 = vmatpush1.bf16.msra.mxu0 %v1526
        %2084 = vmatprep.subr.bf16.mxu0 %v1529
        %2085 = vmatpush1.bf16.msra.mxu0 %v1528
        %2086 = vmatprep.subr.bf16.mxu0 %v1531
        %2087 = vmatpush1.bf16.msra.mxu0 %v1530
        %2088 = vmatprep.subr.bf16.mxu0 %v1533
        %2089 = vmatpush1.bf16.msra.mxu0 %v1532
        %2090 = vmatprep.subr.bf16.mxu0 %v1535
        %2091 = vmatpush1.bf16.msra.mxu0 %v1534
        %2092 = vmatprep.subr.bf16.mxu0 %v1537
        %2093 = vmatpush1.bf16.msra.mxu0 %v1536
        %2094 = vmatprep.subr.bf16.mxu0 %v1539
        %2095 = vmatpush1.bf16.msra.mxu0 %v1538
        %2096 = vmatprep.subr.bf16.mxu0 %v1541
        %2097 = vmatpush1.bf16.msra.mxu0 %v1540
        %2098 = vmatprep.subr.bf16.mxu0 %v1543
        %2099 = vmatpush1.bf16.msra.mxu0 %v1542
        %2100 = vmatprep.subr.bf16.mxu0 %v1545
        %2101 = vmatpush1.bf16.msra.mxu0 %v1544
        %2102 = vmatprep.subr.bf16.mxu0 %v1547
        %2103 = vmatpush1.bf16.msra.mxu0 %v1546
        %2104 = vmatprep.subr.bf16.mxu0 %v1549
        %2105 = vmatpush1.bf16.msra.mxu0 %v1548
        %2106 = vmatprep.subr.bf16.mxu0 %v1551
        %2107 = vmatpush1.bf16.msra.mxu0 %v1550
        %2108 = vmatprep.subr.bf16.mxu0 %v1553
        %2109 = vmatpush1.bf16.msra.mxu0 %v1552
        %2110 = vmatprep.subr.bf16.mxu0 %v1555
        %2111 = vmatpush1.bf16.msra.mxu0 %v1554
        %2112 = vmatprep.subr.bf16.mxu0 %v1557
        %2113 = vmatpush1.bf16.msra.mxu0 %v1556
        %2114 = vmatprep.mubr.bf16.mxu0 %v607
        %2115 = vmatmul.mubr.bf16.gmra.mrb[0].mxu0 %v606
        %v2116 = vpop.f32.mrb[0].mxu0
        %v2117 = vadd.f32 %v2074, %v2116
        %v2118 = vpop.f32.mrb[0].mxu0
        %v2119 = vadd.f32 %v2076, %v2118
        %v2120 = vpop.f32.mrb[0].mxu0
        %v2121 = vadd.f32 %v2078, %v2120
        %v2122 = vpop.f32.mrb[0].mxu0
        %v2123 = vadd.f32 %v2080, %v2122
        %2124 = vdwg.mxu0
        %2125 = vmatprep.subr.bf16.mxu0 %v1559
        %2126 = vmatpush1.bf16.msra.mxu0 %v1558
        %2127 = vmatprep.subr.bf16.mxu0 %v1561
        %2128 = vmatpush1.bf16.msra.mxu0 %v1560
        %2129 = vmatprep.subr.bf16.mxu0 %v1563
        %2130 = vmatpush1.bf16.msra.mxu0 %v1562
        %2131 = vmatprep.subr.bf16.mxu0 %v1565
        %2132 = vmatpush1.bf16.msra.mxu0 %v1564
        %2133 = vmatprep.subr.bf16.mxu0 %v1567
        %2134 = vmatpush1.bf16.msra.mxu0 %v1566
        %2135 = vmatprep.subr.bf16.mxu0 %v1569
        %2136 = vmatpush1.bf16.msra.mxu0 %v1568
        %2137 = vmatprep.subr.bf16.mxu0 %v1571
        %2138 = vmatpush1.bf16.msra.mxu0 %v1570
        %2139 = vmatprep.subr.bf16.mxu0 %v1573
        %2140 = vmatpush1.bf16.msra.mxu0 %v1572
        %2141 = vmatprep.subr.bf16.mxu0 %v1575
        %2142 = vmatpush1.bf16.msra.mxu0 %v1574
        %2143 = vmatprep.subr.bf16.mxu0 %v1577
        %2144 = vmatpush1.bf16.msra.mxu0 %v1576
        %2145 = vmatprep.subr.bf16.mxu0 %v1579
        %2146 = vmatpush1.bf16.msra.mxu0 %v1578
        %2147 = vmatprep.subr.bf16.mxu0 %v1581
        %2148 = vmatpush1.bf16.msra.mxu0 %v1580
        %2149 = vmatprep.subr.bf16.mxu0 %v1583
        %2150 = vmatpush1.bf16.msra.mxu0 %v1582
        %2151 = vmatprep.subr.bf16.mxu0 %v1585
        %2152 = vmatpush1.bf16.msra.mxu0 %v1584
        %2153 = vmatprep.subr.bf16.mxu0 %v1587
        %2154 = vmatpush1.bf16.msra.mxu0 %v1586
        %2155 = vmatprep.subr.bf16.mxu0 %v1589
        %2156 = vmatpush1.bf16.msra.mxu0 %v1588
        %2157 = vmatprep.mubr.bf16.mxu0 %v609
        %2158 = vmatmul.mubr.bf16.gmra.mrb[0].mxu0 %v608
        %v2159 = vpop.f32.mrb[0].mxu0
        %v2160 = vadd.f32 %v2117, %v2159
        %v2161 = vpop.f32.mrb[0].mxu0
        %v2162 = vadd.f32 %v2119, %v2161
        %v2163 = vpop.f32.mrb[0].mxu0
        %v2164 = vadd.f32 %v2121, %v2163
        %v2165 = vpop.f32.mrb[0].mxu0
        %v2166 = vadd.f32 %v2123, %v2165
        %2167 = vdwg.mxu0
        %2168 = vmatprep.subr.bf16.mxu0 %v1591
        %2169 = vmatpush1.bf16.msra.mxu0 %v1590
        %2170 = vmatprep.subr.bf16.mxu0 %v1593
        %2171 = vmatpush1.bf16.msra.mxu0 %v1592
        %2172 = vmatprep.subr.bf16.mxu0 %v1595
        %2173 = vmatpush1.bf16.msra.mxu0 %v1594
        %2174 = vmatprep.subr.bf16.mxu0 %v1597
        %2175 = vmatpush1.bf16.msra.mxu0 %v1596
        %2176 = vmatprep.subr.bf16.mxu0 %v1599
        %2177 = vmatpush1.bf16.msra.mxu0 %v1598
        %2178 = vmatprep.subr.bf16.mxu0 %v1601
        %2179 = vmatpush1.bf16.msra.mxu0 %v1600
        %2180 = vmatprep.subr.bf16.mxu0 %v1603
        %2181 = vmatpush1.bf16.msra.mxu0 %v1602
        %2182 = vmatprep.subr.bf16.mxu0 %v1605
        %2183 = vmatpush1.bf16.msra.mxu0 %v1604
        %2184 = vmatprep.subr.bf16.mxu0 %v1607
        %2185 = vmatpush1.bf16.msra.mxu0 %v1606
        %2186 = vmatprep.subr.bf16.mxu0 %v1609
        %2187 = vmatpush1.bf16.msra.mxu0 %v1608
        %2188 = vmatprep.subr.bf16.mxu0 %v1611
        %2189 = vmatpush1.bf16.msra.mxu0 %v1610
        %2190 = vmatprep.subr.bf16.mxu0 %v1613
        %2191 = vmatpush1.bf16.msra.mxu0 %v1612
        %2192 = vmatprep.subr.bf16.mxu0 %v1615
        %2193 = vmatpush1.bf16.msra.mxu0 %v1614
        %2194 = vmatprep.subr.bf16.mxu0 %v1617
        %2195 = vmatpush1.bf16.msra.mxu0 %v1616
        %2196 = vmatprep.subr.bf16.mxu0 %v1619
        %2197 = vmatpush1.bf16.msra.mxu0 %v1618
        %2198 = vmatprep.subr.bf16.mxu0 %v1621
        %2199 = vmatpush1.bf16.msra.mxu0 %v1620
        %2200 = vmatprep.mubr.bf16.mxu0 %v611
        %2201 = vmatmul.mubr.bf16.gmra.mrb[0].mxu0 %v610
        %v2202 = vpop.f32.mrb[0].mxu0
        %v2203 = vadd.f32 %v2160, %v2202
        %v2204 = vpop.f32.mrb[0].mxu0
        %v2205 = vadd.f32 %v2162, %v2204
        %v2206 = vpop.f32.mrb[0].mxu0
        %v2207 = vadd.f32 %v2164, %v2206
        %v2208 = vpop.f32.mrb[0].mxu0
        %v2209 = vadd.f32 %v2166, %v2208
        %2210 = vdwg.mxu0
        %2211 = vmatprep.subr.bf16.mxu0 %v1623
        %2212 = vmatpush1.bf16.msra.mxu0 %v1622
        %2213 = vmatprep.subr.bf16.mxu0 %v1625
        %2214 = vmatpush1.bf16.msra.mxu0 %v1624
        %2215 = vmatprep.subr.bf16.mxu0 %v1627
        %2216 = vmatpush1.bf16.msra.mxu0 %v1626
        %2217 = vmatprep.subr.bf16.mxu0 %v1629
        %2218 = vmatpush1.bf16.msra.mxu0 %v1628
        %2219 = vmatprep.subr.bf16.mxu0 %v1631
        %2220 = vmatpush1.bf16.msra.mxu0 %v1630
        %2221 = vmatprep.subr.bf16.mxu0 %v1633
        %2222 = vmatpush1.bf16.msra.mxu0 %v1632
        %2223 = vmatprep.subr.bf16.mxu0 %v1635
        %2224 = vmatpush1.bf16.msra.mxu0 %v1634
        %2225 = vmatprep.subr.bf16.mxu0 %v1637
        %2226 = vmatpush1.bf16.msra.mxu0 %v1636
        %2227 = vmatprep.subr.bf16.mxu0 %v1639
        %2228 = vmatpush1.bf16.msra.mxu0 %v1638
        %2229 = vmatprep.subr.bf16.mxu0 %v1641
        %2230 = vmatpush1.bf16.msra.mxu0 %v1640
        %2231 = vmatprep.subr.bf16.mxu0 %v1643
        %2232 = vmatpush1.bf16.msra.mxu0 %v1642
        %2233 = vmatprep.subr.bf16.mxu0 %v1645
        %2234 = vmatpush1.bf16.msra.mxu0 %v1644
        %2235 = vmatprep.subr.bf16.mxu0 %v1647
        %2236 = vmatpush1.bf16.msra.mxu0 %v1646
        %2237 = vmatprep.subr.bf16.mxu0 %v1649
        %2238 = vmatpush1.bf16.msra.mxu0 %v1648
        %2239 = vmatprep.subr.bf16.mxu0 %v1651
        %2240 = vmatpush1.bf16.msra.mxu0 %v1650
        %2241 = vmatprep.subr.bf16.mxu0 %v1653
        %2242 = vmatpush1.bf16.msra.mxu0 %v1652
        %2243 = vmatprep.mubr.bf16.mxu0 %v613
        %2244 = vmatmul.mubr.bf16.gmra.mrb[0].mxu0 %v612
        %v2245 = vpop.f32.mrb[0].mxu0
        %v2246 = vadd.f32 %v2203, %v2245
        %v2247 = vpop.f32.mrb[0].mxu0
        %v2248 = vadd.f32 %v2205, %v2247
        %v2249 = vpop.f32.mrb[0].mxu0
        %v2250 = vadd.f32 %v2207, %v2249
        %v2251 = vpop.f32.mrb[0].mxu0
        %v2252 = vadd.f32 %v2209, %v2251
        %2253 = vdwg.mxu0
        %2254 = vst [vmem:[%s254] sm:$0xff] %v2246
        %2255 = vst [vmem:[%s254 + $0x8] sm:$0xff] %v2248
        %2256 = vst [vmem:[%s254 + $0x10] sm:$0xff] %v2250
        %2257 = vst [vmem:[%s254 + $0x18] sm:$0xff] %v2252
        %s2258 = sand.u32 %s120, 1
        %s2259 = sand.u32 %s120, 1
        %s2260 = smul.addr %s2259, 32
        %s2261 = scalar_lea.vmem [#allocation6], %s2260
        // Predicated region
        $region41: #{pallas_linear.1} parent=31 // pred_check
          %p2262 = pneg %p130
        $region42: #{pallas_linear.1} parent=31 // pred_check_branch
          %2264 = sbr.rel (%p2262) target = $region44
        $region43: #{pallas_linear.1} parent=31 // pred_region
          %s2265 = smul.u32 2, %s24
          %s2266 = smul.u32 2, %s25
          %s2267 = smul.addr %s2265, 4
          %s2268 = sadd.s32 %s2266, %s2267
          %s2269 = smul.addr %s2268, 8
          %s2270 = scalar_lea.vmem %s3, %s2269
          // Predicated region
          $region45: #{pallas_linear.1} parent=43 // pred_check
            _
          $region46: #{pallas_linear.1} parent=43 // pred_check_branch
            %2272 = sbr.rel (0) target = $region48
          $region47: #{pallas_linear.1} parent=43 // pred_region
            // Predicated region
            $region49: #{pallas_linear.1} parent=47 // pred_check
              _
            $region50: #{pallas_linear.1} parent=47 // pred_check_branch
              %2274 = sbr.rel (0) target = $region52
            $region51: #{pallas_linear.1} parent=47 // pred_region
              loop: start=0, step=1, limit=1
              $region53: #{pallas_linear.1} parent=51 // loop_pre_header
                _
              $region54: #{pallas_linear.1} parent=51 // loop_header
                %s2276 = sphi 0, %s2280
                %p2277 = scmp.ge.s32.totalorder %s2276, 1
                %s2281 = sphi %s2261, %s2261
                %s2282 = sphi %s2270, %s2270
              $region55: #{pallas_linear.1} parent=51 // loop_header_branch
                %2279 = sbr.rel (%p2277) target = $region59
              $region56: #{pallas_linear.1} parent=51 // loop_body
                %v2283 = vld [vmem:[%s2281] sm:$0xff]
                %2284 = vst [vmem:[%s2282] sm:$0xff] %v2283
                %v2285 = vld [vmem:[%s2281 + $0x8] sm:$0xff]
                %2286 = vst [vmem:[%s2282 + $0x8] sm:$0xff] %v2285
                %v2287 = vld [vmem:[%s2281 + $0x10] sm:$0xff]
                %2288 = vst [vmem:[%s2282 + $0x20] sm:$0xff] %v2287
                %v2289 = vld [vmem:[%s2281 + $0x18] sm:$0xff]
                %2290 = vst [vmem:[%s2282 + $0x28] sm:$0xff] %v2289
              $region57: #{pallas_linear.1} parent=51 // loop_footer
                %s2280 = sadd.s32 1, %s2276
              $region58: #{pallas_linear.1} parent=51 // loop_footer_branch
                %2275 = sbr.rel target = $region54
              $region59: #{pallas_linear.1} parent=51 // loop_exit
                _
            $region52: #{pallas_linear.1} parent=47 // pred_fallthru
              _
            // Predicated region
            $region60: #{pallas_linear.1} parent=47 // pred_check
              _
            $region61: #{pallas_linear.1} parent=47 // pred_check_branch
              %2292 = sbr.rel target = $region63
            $region62: #{pallas_linear.1} parent=47 // pred_region
              _
            $region63: #{pallas_linear.1} parent=47 // pred_fallthru
              _
          $region48: #{pallas_linear.1} parent=43 // pred_fallthru
            _
          %2293 = vnop
        $region44: #{pallas_linear.1} parent=31 // pred_fallthru
          _
      $region32: #{pallas_linear.1} parent=5 // pred_fallthru
        _
      %p2294 = scmp.le.s32.totalorder 2, %s15
      // Predicated region
      $region64: #{pallas_linear.1} parent=5 // pred_check
        %p2295 = pneg %p2294
      $region65: #{pallas_linear.1} parent=5 // pred_check_branch
        %2297 = sbr.rel (%p2295) target = $region67
      $region66: #{pallas_linear.1} parent=5 // pred_region
        %s2298 = ssub.s32 %s15, 2
        // Predicated region
        $region68: #{pallas_linear.1} parent=66 // pred_check
          %p2299 = pneg %p136
        $region69: #{pallas_linear.1} parent=66 // pred_check_branch
          %2301 = sbr.rel (%p2299) target = $region71
        $region70: #{pallas_linear.1} parent=66 // pred_region
          %s2302 = sand.u32 %s121, 1
          %s2303 = sand.u32 %s121, 1
          %s2304 = smul.addr %s2303, 32
          %s2305 = scalar_lea.vmem [#allocation6], %s2304
        $region71: #{pallas_linear.1} parent=66 // pred_fallthru
          _
      $region67: #{pallas_linear.1} parent=5 // pred_fallthru
        _
    $region6: #{pallas_linear.1} parent=1 // loop_footer
      %s19 = sadd.s32 1, %s15
    $region7: #{pallas_linear.1} parent=1 // loop_footer_branch
      %14 = sbr.rel target = $region3
    $region8: #{pallas_linear.1} parent=1 // loop_exit
      _
    %2306 = vsyncpa [#allocation3], 1
    %s2307 = scalar_lea.sflag [#allocation3], 1
    %2308 = vsyncpa %s2307, 1
    %2309 = vsyncpa [#allocation5], 1
    %s2310 = scalar_lea.sflag [#allocation5], 1
    %2311 = vsyncpa %s2310, 1

</llo_original>
